<compile_context>
chip_gen: v6e
topology: v6e:2x2x1
jax: 0.10.0
libtpu: 0.0.40
codegen_flags: <defaults>
</compile_context>

<pallas_src>
import jax
import jax.numpy as jnp
from jax.experimental import pallas as pl
from jax.experimental.pallas import tpu as pltpu

INPUT_DIM = 7
H1 = 32
H2 = 16
SUBLANES = 8       # f32 sublane count: pad batch to a multiple of this
BATCH_BLOCK = 8    # batch tile per grid step (parallel axis)


def _lstm_act(gates, hidden, c):
    """Gate activations with (i, f, o, g) column order.

    One contiguous sigmoid over the first 3*hidden lanes and one tanh over the
    last hidden lanes (2 EUP op streams per cell instead of 4).
    """
    sg = jax.nn.sigmoid(gates[:, : 3 * hidden])
    g = jnp.tanh(gates[:, 3 * hidden:])
    i = sg[:, :hidden]
    f = sg[:, hidden: 2 * hidden]
    o = sg[:, 2 * hidden: 3 * hidden]
    c_new = f * c + i * g
    h_new = o * jnp.tanh(c_new)
    return h_new, c_new


def _net_kernel(x_ref,                      # (S, Bb, INPUT_DIM) time-major tile
                w1i_ref, w1h_ref, b1_ref,   # LSTM1: (I,4H1), (H1,4H1), (1,4H1)
                w2_ref, b2_ref,             # LSTM2 fused: (H1+H2,4H2), (1,4H2)
                wf_ref, bf_ref,             # FC: (H2,1), (1,1)
                out_ref):                   # (Bb, 1)
    seq_len, bb, feat = x_ref.shape

    w1h = w1h_ref[...]
    w2 = w2_ref[...]
    # Hoisted bias broadcast (not re-materialized every timestep).
    b2 = jnp.broadcast_to(b2_ref[...], (bb, 4 * H2))

    # Hoist the layer-1 input projection out of the recurrence: one well-shaped
    # matmul over all timesteps instead of S tiny K=7 matmuls on the serial path.
    x_all = x_ref[...].reshape(seq_len * bb, feat)
    x1 = jnp.dot(x_all, w1i_ref[...],
                 preferred_element_type=jnp.float32) + b1_ref[...]
    x1 = x1.reshape(seq_len, bb, 4 * H1)

    h1 = jnp.zeros((bb, H1), jnp.float32)
    c1 = jnp.zeros((bb, H1), jnp.float32)
    h2 = jnp.zeros((bb, H2), jnp.float32)
    c2 = jnp.zeros((bb, H2), jnp.float32)

    # seq_len is static; fully unrolled loop -> static indices into x1 and
    # cross-timestep scheduling visibility.
    for t in range(seq_len):
        gates1 = x1[t] + jnp.dot(h1, w1h, preferred_element_type=jnp.float32)
        h1, c1 = _lstm_act(gates1, H1, c1)
        # Layer-2 input (h1_t) and recurrent state (h2_{t-1}) share one fused
        # (H1+H2, 4H2) weight -> a single MXU push per timestep for layer 2.
        hh = jnp.concatenate([h1, h2], axis=-1)
        gates2 = jnp.dot(hh, w2, preferred_element_type=jnp.float32) + b2
        h2, c2 = _lstm_act(gates2, H2, c2)

    logit = jnp.dot(h2, wf_ref[...],
                    preferred_element_type=jnp.float32) + bf_ref[...]
    out_ref[...] = logit.astype(out_ref.dtype)


def init_params(key):
    """PyTorch-style init: U(-1/sqrt(H), 1/sqrt(H)); biases are bias_ih+bias_hh.

    Weights are stored pre-transposed (x @ W) with gate column order (i, f, o, g).
    Layer-2 input/recurrent weights are stacked into one (H1+H2, 4*H2) matrix.
    """
    ks = jax.random.split(key, 10)

    def u(k, shape, bound):
        return jax.random.uniform(k, shape, jnp.float32, -bound, bound)

    bnd1 = H1 ** -0.5
    bnd2 = H2 ** -0.5
    bndf = H2 ** -0.5

    w2i = u(ks[4], (H1, 4 * H2), bnd2)
    w2h = u(ks[5], (H2, 4 * H2), bnd2)
    return {
        "w1i": u(ks[0], (INPUT_DIM, 4 * H1), bnd1),
        "w1h": u(ks[1], (H1, 4 * H1), bnd1),
        "b1":  u(ks[2], (1, 4 * H1), bnd1) + u(ks[3], (1, 4 * H1), bnd1),
        "w2":  jnp.concatenate([w2i, w2h], axis=0),          # (H1+H2, 4*H2)
        "b2":  u(ks[6], (1, 4 * H2), bnd2) + u(ks[7], (1, 4 * H2), bnd2),
        "wf":  u(ks[8], (H2, 1), bndf),
        "bf":  u(ks[9], (1, 1), bndf),
    }


@jax.jit
def net_forward(x, params):
    """x: (batch, seq, 7) float32 -> (batch, 1) float32."""
    batch, seq, feat = x.shape
    assert feat == INPUT_DIM

    # Pad batch to a sublane multiple so vregs / MXU LHS rows are filled.
    pad = (-batch) % SUBLANES
    bp = batch + pad
    if pad:
        x = jnp.pad(x, ((0, pad), (0, 0), (0, 0)))

    # Time-major so the recurrence indexes timestep t on the leading axis.
    # TODO(synk): for large S*B, fold this transpose into the producer (or a
    # grid-over-time BlockSpec) to avoid the extra HBM pass before the kernel.
    x_tm = jnp.transpose(x, (1, 0, 2))  # (S, Bp, F)

    def full(shape):
        return pl.BlockSpec(shape, lambda i, s=len(shape): (0,) * s)

    out = pl.pallas_call(
        _net_kernel,
        out_shape=jax.ShapeDtypeStruct((bp, 1), jnp.float32),
        grid_spec=pltpu.PrefetchScalarGridSpec(
            num_scalar_prefetch=0,
            grid=(bp // BATCH_BLOCK,),
            in_specs=[
                pl.BlockSpec((seq, BATCH_BLOCK, INPUT_DIM),
                             lambda i: (0, i, 0)),
                full((INPUT_DIM, 4 * H1)),
                full((H1, 4 * H1)),
                full((1, 4 * H1)),
                full((H1 + H2, 4 * H2)),
                full((1, 4 * H2)),
                full((H2, 1)),
                full((1, 1)),
            ],
            out_specs=pl.BlockSpec((BATCH_BLOCK, 1), lambda i: (i, 0)),
        ),
        compiler_params=pltpu.CompilerParams(
            dimension_semantics=("parallel",)),
    )(
        x_tm,
        params["w1i"], params["w1h"], params["b1"],
        params["w2"], params["b2"],
        params["wf"], params["bf"],
    )
    return out[:batch]


def _reference_forward(x, params):
    """Pure-JAX reference with identical math/layout (for validation)."""
    b, s, _ = x.shape
    h1 = jnp.zeros((b, H1), jnp.float32)
    c1 = jnp.zeros((b, H1), jnp.float32)
    h2 = jnp.zeros((b, H2), jnp.float32)
    c2 = jnp.zeros((b, H2), jnp.float32)
    w2i, w2h = params["w2"][:H1], params["w2"][H1:]

    def act(gates, hid, c):
        i = jax.nn.sigmoid(gates[:, :hid])
        f = jax.nn.sigmoid(gates[:, hid:2 * hid])
        o = jax.nn.sigmoid(gates[:, 2 * hid:3 * hid])
        g = jnp.tanh(gates[:, 3 * hid:])
        c_new = f * c + i * g
        return o * jnp.tanh(c_new), c_new

    for t in range(s):
        g1 = x[:, t] @ params["w1i"] + h1 @ params["w1h"] + params["b1"]
        h1, c1 = act(g1, H1, c1)
        g2 = h1 @ w2i + h2 @ w2h + params["b2"]
        h2, c2 = act(g2, H2, c2)
    return h2 @ params["wf"] + params["bf"]


if __name__ == "__main__":
    key = jax.random.PRNGKey(0)
    k_x, k_p = jax.random.split(key)

    batch, seq = 2, 8
    x = jax.random.normal(k_x, (batch, seq, INPUT_DIM), jnp.float32)
    params = init_params(k_p)

    logit = net_forward(x, params)
    jax.block_until_ready(logit)
    assert logit.shape == (batch, 1)

    ref = _reference_forward(x, params)
    assert jnp.allclose(logit, ref, atol=2e-3, rtol=2e-3)
    print("KERNEL_OK")
</pallas_src>

<mosaic_0001>
module attributes {stable_mosaic.version = 11 : i64} {
  func.func @_net_kernel(%arg0: i32, %arg1: memref<8x8x7xf32, #tpu.memory_space<vmem>>, %arg2: memref<7x128xf32, #tpu.memory_space<vmem>>, %arg3: memref<32x128xf32, #tpu.memory_space<vmem>>, %arg4: memref<1x128xf32, #tpu.memory_space<vmem>>, %arg5: memref<48x64xf32, #tpu.memory_space<vmem>>, %arg6: memref<1x64xf32, #tpu.memory_space<vmem>>, %arg7: memref<16x1xf32, #tpu.memory_space<vmem>>, %arg8: memref<1x1xf32, #tpu.memory_space<vmem>>, %arg9: memref<8x1xf32, #tpu.memory_space<vmem>>) attributes {dimension_semantics = [#tpu.dimension_semantics<parallel>], iteration_bounds = array<i64: 1>, scalar_prefetch = 0 : i64, scratch_operands = 0 : i64, tpu.core_type = #tpu.core_type<tc>, window_params = [{transform_indices = @transform_0, window_bounds = array<i64: 8, 8, 7>}, {pipeline_mode = #tpu.pipeline_mode<synchronous>, transform_indices = @transform_1, window_bounds = array<i64: 7, 128>}, {pipeline_mode = #tpu.pipeline_mode<synchronous>, transform_indices = @transform_2, window_bounds = array<i64: 32, 128>}, {pipeline_mode = #tpu.pipeline_mode<synchronous>, transform_indices = @transform_3, window_bounds = array<i64: 1, 128>}, {pipeline_mode = #tpu.pipeline_mode<synchronous>, transform_indices = @transform_4, window_bounds = array<i64: 48, 64>}, {pipeline_mode = #tpu.pipeline_mode<synchronous>, transform_indices = @transform_5, window_bounds = array<i64: 1, 64>}, {pipeline_mode = #tpu.pipeline_mode<synchronous>, transform_indices = @transform_6, window_bounds = array<i64: 16, 1>}, {pipeline_mode = #tpu.pipeline_mode<synchronous>, transform_indices = @transform_7, window_bounds = array<i64: 1, 1>}, {transform_indices = @transform_8, window_bounds = array<i64: 8, 1>}]} {
    %c0 = arith.constant 0 : index
    %c0_0 = arith.constant 0 : index
    %0 = vector.load %arg3[%c0, %c0_0] : memref<32x128xf32, #tpu.memory_space<vmem>>, vector<32x128xf32>
    %c0_1 = arith.constant 0 : index
    %c0_2 = arith.constant 0 : index
    %1 = vector.load %arg5[%c0_1, %c0_2] : memref<48x64xf32, #tpu.memory_space<vmem>>, vector<48x64xf32>
    %c0_3 = arith.constant 0 : index
    %c0_4 = arith.constant 0 : index
    %2 = vector.load %arg6[%c0_3, %c0_4] : memref<1x64xf32, #tpu.memory_space<vmem>>, vector<1x64xf32>
    %3 = vector.shape_cast %2 : vector<1x64xf32> to vector<1x64xf32>
    %4 = vector.broadcast %3 : vector<1x64xf32> to vector<8x64xf32>
    %c0_5 = arith.constant 0 : index
    %c0_6 = arith.constant 0 : index
    %c0_7 = arith.constant 0 : index
    %5 = vector.load %arg1[%c0_5, %c0_6, %c0_7] : memref<8x8x7xf32, #tpu.memory_space<vmem>>, vector<8x8x7xf32>
    %6 = vector.shape_cast %5 : vector<8x8x7xf32> to vector<64x7xf32>
    %c0_8 = arith.constant 0 : index
    %c0_9 = arith.constant 0 : index
    %7 = vector.load %arg2[%c0_8, %c0_9] : memref<7x128xf32, #tpu.memory_space<vmem>>, vector<7x128xf32>
    %cst = arith.constant dense<0.000000e+00> : vector<64x128xf32>
    %8 = tpu.matmul %6, %7, %cst {dimension_numbers = #tpu.dot_dimension_numbers<[1], [0], [0], [1], [0, 0, 1, 1], [], []>} : vector<64x7xf32>, vector<7x128xf32>, vector<64x128xf32> -> vector<64x128xf32>
    %c0_10 = arith.constant 0 : index
    %c0_11 = arith.constant 0 : index
    %9 = vector.load %arg4[%c0_10, %c0_11] : memref<1x128xf32, #tpu.memory_space<vmem>>, vector<1x128xf32>
    %10 = vector.broadcast %9 : vector<1x128xf32> to vector<64x128xf32>
    %11 = arith.addf %8, %10 : vector<64x128xf32>
    %12 = vector.shape_cast %11 : vector<64x128xf32> to vector<8x8x128xf32>
    %cst_12 = arith.constant 0.000000e+00 : f32
    %13 = vector.broadcast %cst_12 : f32 to vector<8x32xf32>
    %cst_13 = arith.constant 0.000000e+00 : f32
    %14 = vector.broadcast %cst_13 : f32 to vector<8x32xf32>
    %cst_14 = arith.constant 0.000000e+00 : f32
    %15 = vector.broadcast %cst_14 : f32 to vector<8x16xf32>
    %cst_15 = arith.constant 0.000000e+00 : f32
    %16 = vector.broadcast %cst_15 : f32 to vector<8x16xf32>
    %17 = vector.extract_strided_slice %12 {offsets = [0, 0, 0], sizes = [1, 8, 128], strides = [1, 1, 1]} : vector<8x8x128xf32> to vector<1x8x128xf32>
    %18 = vector.shape_cast %17 : vector<1x8x128xf32> to vector<8x128xf32>
    %cst_16 = arith.constant dense<0.000000e+00> : vector<8x128xf32>
    %19 = tpu.matmul %13, %0, %cst_16 {dimension_numbers = #tpu.dot_dimension_numbers<[1], [0], [0], [1], [0, 0, 1, 1], [], []>} : vector<8x32xf32>, vector<32x128xf32>, vector<8x128xf32> -> vector<8x128xf32>
    %20 = arith.addf %18, %19 : vector<8x128xf32>
    %21 = vector.extract_strided_slice %20 {offsets = [0, 0], sizes = [8, 96], strides = [1, 1]} : vector<8x128xf32> to vector<8x96xf32>
    %22 = arith.negf %21 : vector<8x96xf32>
    %23 = math.exp %22 : vector<8x96xf32>
    %cst_17 = arith.constant 1.000000e+00 : f32
    %24 = vector.broadcast %cst_17 : f32 to vector<8x96xf32>
    %25 = arith.addf %24, %23 : vector<8x96xf32>
    %26 = arith.divf %24, %25 : vector<8x96xf32>
    %27 = vector.extract_strided_slice %20 {offsets = [0, 96], sizes = [8, 32], strides = [1, 1]} : vector<8x128xf32> to vector<8x32xf32>
    %28 = math.tanh %27 : vector<8x32xf32>
    %29 = vector.extract_strided_slice %26 {offsets = [0, 0], sizes = [8, 32], strides = [1, 1]} : vector<8x96xf32> to vector<8x32xf32>
    %30 = vector.extract_strided_slice %26 {offsets = [0, 32], sizes = [8, 32], strides = [1, 1]} : vector<8x96xf32> to vector<8x32xf32>
    %31 = vector.extract_strided_slice %26 {offsets = [0, 64], sizes = [8, 32], strides = [1, 1]} : vector<8x96xf32> to vector<8x32xf32>
    %32 = arith.mulf %30, %14 : vector<8x32xf32>
    %33 = arith.mulf %29, %28 : vector<8x32xf32>
    %34 = arith.addf %32, %33 : vector<8x32xf32>
    %35 = math.tanh %34 : vector<8x32xf32>
    %36 = arith.mulf %31, %35 : vector<8x32xf32>
    %37 = tpu.concatenate %36, %15 in 1 : vector<8x32xf32>, vector<8x16xf32> -> vector<8x48xf32>
    %cst_18 = arith.constant dense<0.000000e+00> : vector<8x64xf32>
    %38 = tpu.matmul %37, %1, %cst_18 {dimension_numbers = #tpu.dot_dimension_numbers<[1], [0], [0], [1], [0, 0, 1, 1], [], []>} : vector<8x48xf32>, vector<48x64xf32>, vector<8x64xf32> -> vector<8x64xf32>
    %39 = arith.addf %38, %4 : vector<8x64xf32>
    %40 = vector.extract_strided_slice %39 {offsets = [0, 0], sizes = [8, 48], strides = [1, 1]} : vector<8x64xf32> to vector<8x48xf32>
    %41 = arith.negf %40 : vector<8x48xf32>
    %42 = math.exp %41 : vector<8x48xf32>
    %cst_19 = arith.constant 1.000000e+00 : f32
    %43 = vector.broadcast %cst_19 : f32 to vector<8x48xf32>
    %44 = arith.addf %43, %42 : vector<8x48xf32>
    %45 = arith.divf %43, %44 : vector<8x48xf32>
    %46 = vector.extract_strided_slice %39 {offsets = [0, 48], sizes = [8, 16], strides = [1, 1]} : vector<8x64xf32> to vector<8x16xf32>
    %47 = math.tanh %46 : vector<8x16xf32>
    %48 = vector.extract_strided_slice %45 {offsets = [0, 0], sizes = [8, 16], strides = [1, 1]} : vector<8x48xf32> to vector<8x16xf32>
    %49 = vector.extract_strided_slice %45 {offsets = [0, 16], sizes = [8, 16], strides = [1, 1]} : vector<8x48xf32> to vector<8x16xf32>
    %50 = vector.extract_strided_slice %45 {offsets = [0, 32], sizes = [8, 16], strides = [1, 1]} : vector<8x48xf32> to vector<8x16xf32>
    %51 = arith.mulf %49, %16 : vector<8x16xf32>
    %52 = arith.mulf %48, %47 : vector<8x16xf32>
    %53 = arith.addf %51, %52 : vector<8x16xf32>
    %54 = math.tanh %53 : vector<8x16xf32>
    %55 = arith.mulf %50, %54 : vector<8x16xf32>
    %56 = vector.extract_strided_slice %12 {offsets = [1, 0, 0], sizes = [1, 8, 128], strides = [1, 1, 1]} : vector<8x8x128xf32> to vector<1x8x128xf32>
    %57 = vector.shape_cast %56 : vector<1x8x128xf32> to vector<8x128xf32>
    %cst_20 = arith.constant dense<0.000000e+00> : vector<8x128xf32>
    %58 = tpu.matmul %36, %0, %cst_20 {dimension_numbers = #tpu.dot_dimension_numbers<[1], [0], [0], [1], [0, 0, 1, 1], [], []>} : vector<8x32xf32>, vector<32x128xf32>, vector<8x128xf32> -> vector<8x128xf32>
    %59 = arith.addf %57, %58 : vector<8x128xf32>
    %60 = vector.extract_strided_slice %59 {offsets = [0, 0], sizes = [8, 96], strides = [1, 1]} : vector<8x128xf32> to vector<8x96xf32>
    %61 = arith.negf %60 : vector<8x96xf32>
    %62 = math.exp %61 : vector<8x96xf32>
    %cst_21 = arith.constant 1.000000e+00 : f32
    %63 = vector.broadcast %cst_21 : f32 to vector<8x96xf32>
    %64 = arith.addf %63, %62 : vector<8x96xf32>
    %65 = arith.divf %63, %64 : vector<8x96xf32>
    %66 = vector.extract_strided_slice %59 {offsets = [0, 96], sizes = [8, 32], strides = [1, 1]} : vector<8x128xf32> to vector<8x32xf32>
    %67 = math.tanh %66 : vector<8x32xf32>
    %68 = vector.extract_strided_slice %65 {offsets = [0, 0], sizes = [8, 32], strides = [1, 1]} : vector<8x96xf32> to vector<8x32xf32>
    %69 = vector.extract_strided_slice %65 {offsets = [0, 32], sizes = [8, 32], strides = [1, 1]} : vector<8x96xf32> to vector<8x32xf32>
    %70 = vector.extract_strided_slice %65 {offsets = [0, 64], sizes = [8, 32], strides = [1, 1]} : vector<8x96xf32> to vector<8x32xf32>
    %71 = arith.mulf %69, %34 : vector<8x32xf32>
    %72 = arith.mulf %68, %67 : vector<8x32xf32>
    %73 = arith.addf %71, %72 : vector<8x32xf32>
    %74 = math.tanh %73 : vector<8x32xf32>
    %75 = arith.mulf %70, %74 : vector<8x32xf32>
    %76 = tpu.concatenate %75, %55 in 1 : vector<8x32xf32>, vector<8x16xf32> -> vector<8x48xf32>
    %cst_22 = arith.constant dense<0.000000e+00> : vector<8x64xf32>
    %77 = tpu.matmul %76, %1, %cst_22 {dimension_numbers = #tpu.dot_dimension_numbers<[1], [0], [0], [1], [0, 0, 1, 1], [], []>} : vector<8x48xf32>, vector<48x64xf32>, vector<8x64xf32> -> vector<8x64xf32>
    %78 = arith.addf %77, %4 : vector<8x64xf32>
    %79 = vector.extract_strided_slice %78 {offsets = [0, 0], sizes = [8, 48], strides = [1, 1]} : vector<8x64xf32> to vector<8x48xf32>
    %80 = arith.negf %79 : vector<8x48xf32>
    %81 = math.exp %80 : vector<8x48xf32>
    %cst_23 = arith.constant 1.000000e+00 : f32
    %82 = vector.broadcast %cst_23 : f32 to vector<8x48xf32>
    %83 = arith.addf %82, %81 : vector<8x48xf32>
    %84 = arith.divf %82, %83 : vector<8x48xf32>
    %85 = vector.extract_strided_slice %78 {offsets = [0, 48], sizes = [8, 16], strides = [1, 1]} : vector<8x64xf32> to vector<8x16xf32>
    %86 = math.tanh %85 : vector<8x16xf32>
    %87 = vector.extract_strided_slice %84 {offsets = [0, 0], sizes = [8, 16], strides = [1, 1]} : vector<8x48xf32> to vector<8x16xf32>
    %88 = vector.extract_strided_slice %84 {offsets = [0, 16], sizes = [8, 16], strides = [1, 1]} : vector<8x48xf32> to vector<8x16xf32>
    %89 = vector.extract_strided_slice %84 {offsets = [0, 32], sizes = [8, 16], strides = [1, 1]} : vector<8x48xf32> to vector<8x16xf32>
    %90 = arith.mulf %88, %53 : vector<8x16xf32>
    %91 = arith.mulf %87, %86 : vector<8x16xf32>
    %92 = arith.addf %90, %91 : vector<8x16xf32>
    %93 = math.tanh %92 : vector<8x16xf32>
    %94 = arith.mulf %89, %93 : vector<8x16xf32>
    %95 = vector.extract_strided_slice %12 {offsets = [2, 0, 0], sizes = [1, 8, 128], strides = [1, 1, 1]} : vector<8x8x128xf32> to vector<1x8x128xf32>
    %96 = vector.shape_cast %95 : vector<1x8x128xf32> to vector<8x128xf32>
    %cst_24 = arith.constant dense<0.000000e+00> : vector<8x128xf32>
    %97 = tpu.matmul %75, %0, %cst_24 {dimension_numbers = #tpu.dot_dimension_numbers<[1], [0], [0], [1], [0, 0, 1, 1], [], []>} : vector<8x32xf32>, vector<32x128xf32>, vector<8x128xf32> -> vector<8x128xf32>
    %98 = arith.addf %96, %97 : vector<8x128xf32>
    %99 = vector.extract_strided_slice %98 {offsets = [0, 0], sizes = [8, 96], strides = [1, 1]} : vector<8x128xf32> to vector<8x96xf32>
    %100 = arith.negf %99 : vector<8x96xf32>
    %101 = math.exp %100 : vector<8x96xf32>
    %cst_25 = arith.constant 1.000000e+00 : f32
    %102 = vector.broadcast %cst_25 : f32 to vector<8x96xf32>
    %103 = arith.addf %102, %101 : vector<8x96xf32>
    %104 = arith.divf %102, %103 : vector<8x96xf32>
    %105 = vector.extract_strided_slice %98 {offsets = [0, 96], sizes = [8, 32], strides = [1, 1]} : vector<8x128xf32> to vector<8x32xf32>
    %106 = math.tanh %105 : vector<8x32xf32>
    %107 = vector.extract_strided_slice %104 {offsets = [0, 0], sizes = [8, 32], strides = [1, 1]} : vector<8x96xf32> to vector<8x32xf32>
    %108 = vector.extract_strided_slice %104 {offsets = [0, 32], sizes = [8, 32], strides = [1, 1]} : vector<8x96xf32> to vector<8x32xf32>
    %109 = vector.extract_strided_slice %104 {offsets = [0, 64], sizes = [8, 32], strides = [1, 1]} : vector<8x96xf32> to vector<8x32xf32>
    %110 = arith.mulf %108, %73 : vector<8x32xf32>
    %111 = arith.mulf %107, %106 : vector<8x32xf32>
    %112 = arith.addf %110, %111 : vector<8x32xf32>
    %113 = math.tanh %112 : vector<8x32xf32>
    %114 = arith.mulf %109, %113 : vector<8x32xf32>
    %115 = tpu.concatenate %114, %94 in 1 : vector<8x32xf32>, vector<8x16xf32> -> vector<8x48xf32>
    %cst_26 = arith.constant dense<0.000000e+00> : vector<8x64xf32>
    %116 = tpu.matmul %115, %1, %cst_26 {dimension_numbers = #tpu.dot_dimension_numbers<[1], [0], [0], [1], [0, 0, 1, 1], [], []>} : vector<8x48xf32>, vector<48x64xf32>, vector<8x64xf32> -> vector<8x64xf32>
    %117 = arith.addf %116, %4 : vector<8x64xf32>
    %118 = vector.extract_strided_slice %117 {offsets = [0, 0], sizes = [8, 48], strides = [1, 1]} : vector<8x64xf32> to vector<8x48xf32>
    %119 = arith.negf %118 : vector<8x48xf32>
    %120 = math.exp %119 : vector<8x48xf32>
    %cst_27 = arith.constant 1.000000e+00 : f32
    %121 = vector.broadcast %cst_27 : f32 to vector<8x48xf32>
    %122 = arith.addf %121, %120 : vector<8x48xf32>
    %123 = arith.divf %121, %122 : vector<8x48xf32>
    %124 = vector.extract_strided_slice %117 {offsets = [0, 48], sizes = [8, 16], strides = [1, 1]} : vector<8x64xf32> to vector<8x16xf32>
    %125 = math.tanh %124 : vector<8x16xf32>
    %126 = vector.extract_strided_slice %123 {offsets = [0, 0], sizes = [8, 16], strides = [1, 1]} : vector<8x48xf32> to vector<8x16xf32>
    %127 = vector.extract_strided_slice %123 {offsets = [0, 16], sizes = [8, 16], strides = [1, 1]} : vector<8x48xf32> to vector<8x16xf32>
    %128 = vector.extract_strided_slice %123 {offsets = [0, 32], sizes = [8, 16], strides = [1, 1]} : vector<8x48xf32> to vector<8x16xf32>
    %129 = arith.mulf %127, %92 : vector<8x16xf32>
    %130 = arith.mulf %126, %125 : vector<8x16xf32>
    %131 = arith.addf %129, %130 : vector<8x16xf32>
    %132 = math.tanh %131 : vector<8x16xf32>
    %133 = arith.mulf %128, %132 : vector<8x16xf32>
    %134 = vector.extract_strided_slice %12 {offsets = [3, 0, 0], sizes = [1, 8, 128], strides = [1, 1, 1]} : vector<8x8x128xf32> to vector<1x8x128xf32>
    %135 = vector.shape_cast %134 : vector<1x8x128xf32> to vector<8x128xf32>
    %cst_28 = arith.constant dense<0.000000e+00> : vector<8x128xf32>
    %136 = tpu.matmul %114, %0, %cst_28 {dimension_numbers = #tpu.dot_dimension_numbers<[1], [0], [0], [1], [0, 0, 1, 1], [], []>} : vector<8x32xf32>, vector<32x128xf32>, vector<8x128xf32> -> vector<8x128xf32>
    %137 = arith.addf %135, %136 : vector<8x128xf32>
    %138 = vector.extract_strided_slice %137 {offsets = [0, 0], sizes = [8, 96], strides = [1, 1]} : vector<8x128xf32> to vector<8x96xf32>
    %139 = arith.negf %138 : vector<8x96xf32>
    %140 = math.exp %139 : vector<8x96xf32>
    %cst_29 = arith.constant 1.000000e+00 : f32
    %141 = vector.broadcast %cst_29 : f32 to vector<8x96xf32>
    %142 = arith.addf %141, %140 : vector<8x96xf32>
    %143 = arith.divf %141, %142 : vector<8x96xf32>
    %144 = vector.extract_strided_slice %137 {offsets = [0, 96], sizes = [8, 32], strides = [1, 1]} : vector<8x128xf32> to vector<8x32xf32>
    %145 = math.tanh %144 : vector<8x32xf32>
    %146 = vector.extract_strided_slice %143 {offsets = [0, 0], sizes = [8, 32], strides = [1, 1]} : vector<8x96xf32> to vector<8x32xf32>
    %147 = vector.extract_strided_slice %143 {offsets = [0, 32], sizes = [8, 32], strides = [1, 1]} : vector<8x96xf32> to vector<8x32xf32>
    %148 = vector.extract_strided_slice %143 {offsets = [0, 64], sizes = [8, 32], strides = [1, 1]} : vector<8x96xf32> to vector<8x32xf32>
    %149 = arith.mulf %147, %112 : vector<8x32xf32>
    %150 = arith.mulf %146, %145 : vector<8x32xf32>
    %151 = arith.addf %149, %150 : vector<8x32xf32>
    %152 = math.tanh %151 : vector<8x32xf32>
    %153 = arith.mulf %148, %152 : vector<8x32xf32>
    %154 = tpu.concatenate %153, %133 in 1 : vector<8x32xf32>, vector<8x16xf32> -> vector<8x48xf32>
    %cst_30 = arith.constant dense<0.000000e+00> : vector<8x64xf32>
    %155 = tpu.matmul %154, %1, %cst_30 {dimension_numbers = #tpu.dot_dimension_numbers<[1], [0], [0], [1], [0, 0, 1, 1], [], []>} : vector<8x48xf32>, vector<48x64xf32>, vector<8x64xf32> -> vector<8x64xf32>
    %156 = arith.addf %155, %4 : vector<8x64xf32>
    %157 = vector.extract_strided_slice %156 {offsets = [0, 0], sizes = [8, 48], strides = [1, 1]} : vector<8x64xf32> to vector<8x48xf32>
    %158 = arith.negf %157 : vector<8x48xf32>
    %159 = math.exp %158 : vector<8x48xf32>
    %cst_31 = arith.constant 1.000000e+00 : f32
    %160 = vector.broadcast %cst_31 : f32 to vector<8x48xf32>
    %161 = arith.addf %160, %159 : vector<8x48xf32>
    %162 = arith.divf %160, %161 : vector<8x48xf32>
    %163 = vector.extract_strided_slice %156 {offsets = [0, 48], sizes = [8, 16], strides = [1, 1]} : vector<8x64xf32> to vector<8x16xf32>
    %164 = math.tanh %163 : vector<8x16xf32>
    %165 = vector.extract_strided_slice %162 {offsets = [0, 0], sizes = [8, 16], strides = [1, 1]} : vector<8x48xf32> to vector<8x16xf32>
    %166 = vector.extract_strided_slice %162 {offsets = [0, 16], sizes = [8, 16], strides = [1, 1]} : vector<8x48xf32> to vector<8x16xf32>
    %167 = vector.extract_strided_slice %162 {offsets = [0, 32], sizes = [8, 16], strides = [1, 1]} : vector<8x48xf32> to vector<8x16xf32>
    %168 = arith.mulf %166, %131 : vector<8x16xf32>
    %169 = arith.mulf %165, %164 : vector<8x16xf32>
    %170 = arith.addf %168, %169 : vector<8x16xf32>
    %171 = math.tanh %170 : vector<8x16xf32>
    %172 = arith.mulf %167, %171 : vector<8x16xf32>
    %173 = vector.extract_strided_slice %12 {offsets = [4, 0, 0], sizes = [1, 8, 128], strides = [1, 1, 1]} : vector<8x8x128xf32> to vector<1x8x128xf32>
    %174 = vector.shape_cast %173 : vector<1x8x128xf32> to vector<8x128xf32>
    %cst_32 = arith.constant dense<0.000000e+00> : vector<8x128xf32>
    %175 = tpu.matmul %153, %0, %cst_32 {dimension_numbers = #tpu.dot_dimension_numbers<[1], [0], [0], [1], [0, 0, 1, 1], [], []>} : vector<8x32xf32>, vector<32x128xf32>, vector<8x128xf32> -> vector<8x128xf32>
    %176 = arith.addf %174, %175 : vector<8x128xf32>
    %177 = vector.extract_strided_slice %176 {offsets = [0, 0], sizes = [8, 96], strides = [1, 1]} : vector<8x128xf32> to vector<8x96xf32>
    %178 = arith.negf %177 : vector<8x96xf32>
    %179 = math.exp %178 : vector<8x96xf32>
    %cst_33 = arith.constant 1.000000e+00 : f32
    %180 = vector.broadcast %cst_33 : f32 to vector<8x96xf32>
    %181 = arith.addf %180, %179 : vector<8x96xf32>
    %182 = arith.divf %180, %181 : vector<8x96xf32>
    %183 = vector.extract_strided_slice %176 {offsets = [0, 96], sizes = [8, 32], strides = [1, 1]} : vector<8x128xf32> to vector<8x32xf32>
    %184 = math.tanh %183 : vector<8x32xf32>
    %185 = vector.extract_strided_slice %182 {offsets = [0, 0], sizes = [8, 32], strides = [1, 1]} : vector<8x96xf32> to vector<8x32xf32>
    %186 = vector.extract_strided_slice %182 {offsets = [0, 32], sizes = [8, 32], strides = [1, 1]} : vector<8x96xf32> to vector<8x32xf32>
    %187 = vector.extract_strided_slice %182 {offsets = [0, 64], sizes = [8, 32], strides = [1, 1]} : vector<8x96xf32> to vector<8x32xf32>
    %188 = arith.mulf %186, %151 : vector<8x32xf32>
    %189 = arith.mulf %185, %184 : vector<8x32xf32>
    %190 = arith.addf %188, %189 : vector<8x32xf32>
    %191 = math.tanh %190 : vector<8x32xf32>
    %192 = arith.mulf %187, %191 : vector<8x32xf32>
    %193 = tpu.concatenate %192, %172 in 1 : vector<8x32xf32>, vector<8x16xf32> -> vector<8x48xf32>
    %cst_34 = arith.constant dense<0.000000e+00> : vector<8x64xf32>
    %194 = tpu.matmul %193, %1, %cst_34 {dimension_numbers = #tpu.dot_dimension_numbers<[1], [0], [0], [1], [0, 0, 1, 1], [], []>} : vector<8x48xf32>, vector<48x64xf32>, vector<8x64xf32> -> vector<8x64xf32>
    %195 = arith.addf %194, %4 : vector<8x64xf32>
    %196 = vector.extract_strided_slice %195 {offsets = [0, 0], sizes = [8, 48], strides = [1, 1]} : vector<8x64xf32> to vector<8x48xf32>
    %197 = arith.negf %196 : vector<8x48xf32>
    %198 = math.exp %197 : vector<8x48xf32>
    %cst_35 = arith.constant 1.000000e+00 : f32
    %199 = vector.broadcast %cst_35 : f32 to vector<8x48xf32>
    %200 = arith.addf %199, %198 : vector<8x48xf32>
    %201 = arith.divf %199, %200 : vector<8x48xf32>
    %202 = vector.extract_strided_slice %195 {offsets = [0, 48], sizes = [8, 16], strides = [1, 1]} : vector<8x64xf32> to vector<8x16xf32>
    %203 = math.tanh %202 : vector<8x16xf32>
    %204 = vector.extract_strided_slice %201 {offsets = [0, 0], sizes = [8, 16], strides = [1, 1]} : vector<8x48xf32> to vector<8x16xf32>
    %205 = vector.extract_strided_slice %201 {offsets = [0, 16], sizes = [8, 16], strides = [1, 1]} : vector<8x48xf32> to vector<8x16xf32>
    %206 = vector.extract_strided_slice %201 {offsets = [0, 32], sizes = [8, 16], strides = [1, 1]} : vector<8x48xf32> to vector<8x16xf32>
    %207 = arith.mulf %205, %170 : vector<8x16xf32>
    %208 = arith.mulf %204, %203 : vector<8x16xf32>
    %209 = arith.addf %207, %208 : vector<8x16xf32>
    %210 = math.tanh %209 : vector<8x16xf32>
    %211 = arith.mulf %206, %210 : vector<8x16xf32>
    %212 = vector.extract_strided_slice %12 {offsets = [5, 0, 0], sizes = [1, 8, 128], strides = [1, 1, 1]} : vector<8x8x128xf32> to vector<1x8x128xf32>
    %213 = vector.shape_cast %212 : vector<1x8x128xf32> to vector<8x128xf32>
    %cst_36 = arith.constant dense<0.000000e+00> : vector<8x128xf32>
    %214 = tpu.matmul %192, %0, %cst_36 {dimension_numbers = #tpu.dot_dimension_numbers<[1], [0], [0], [1], [0, 0, 1, 1], [], []>} : vector<8x32xf32>, vector<32x128xf32>, vector<8x128xf32> -> vector<8x128xf32>
    %215 = arith.addf %213, %214 : vector<8x128xf32>
    %216 = vector.extract_strided_slice %215 {offsets = [0, 0], sizes = [8, 96], strides = [1, 1]} : vector<8x128xf32> to vector<8x96xf32>
    %217 = arith.negf %216 : vector<8x96xf32>
    %218 = math.exp %217 : vector<8x96xf32>
    %cst_37 = arith.constant 1.000000e+00 : f32
    %219 = vector.broadcast %cst_37 : f32 to vector<8x96xf32>
    %220 = arith.addf %219, %218 : vector<8x96xf32>
    %221 = arith.divf %219, %220 : vector<8x96xf32>
    %222 = vector.extract_strided_slice %215 {offsets = [0, 96], sizes = [8, 32], strides = [1, 1]} : vector<8x128xf32> to vector<8x32xf32>
    %223 = math.tanh %222 : vector<8x32xf32>
    %224 = vector.extract_strided_slice %221 {offsets = [0, 0], sizes = [8, 32], strides = [1, 1]} : vector<8x96xf32> to vector<8x32xf32>
    %225 = vector.extract_strided_slice %221 {offsets = [0, 32], sizes = [8, 32], strides = [1, 1]} : vector<8x96xf32> to vector<8x32xf32>
    %226 = vector.extract_strided_slice %221 {offsets = [0, 64], sizes = [8, 32], strides = [1, 1]} : vector<8x96xf32> to vector<8x32xf32>
    %227 = arith.mulf %225, %190 : vector<8x32xf32>
    %228 = arith.mulf %224, %223 : vector<8x32xf32>
    %229 = arith.addf %227, %228 : vector<8x32xf32>
    %230 = math.tanh %229 : vector<8x32xf32>
    %231 = arith.mulf %226, %230 : vector<8x32xf32>
    %232 = tpu.concatenate %231, %211 in 1 : vector<8x32xf32>, vector<8x16xf32> -> vector<8x48xf32>
    %cst_38 = arith.constant dense<0.000000e+00> : vector<8x64xf32>
    %233 = tpu.matmul %232, %1, %cst_38 {dimension_numbers = #tpu.dot_dimension_numbers<[1], [0], [0], [1], [0, 0, 1, 1], [], []>} : vector<8x48xf32>, vector<48x64xf32>, vector<8x64xf32> -> vector<8x64xf32>
    %234 = arith.addf %233, %4 : vector<8x64xf32>
    %235 = vector.extract_strided_slice %234 {offsets = [0, 0], sizes = [8, 48], strides = [1, 1]} : vector<8x64xf32> to vector<8x48xf32>
    %236 = arith.negf %235 : vector<8x48xf32>
    %237 = math.exp %236 : vector<8x48xf32>
    %cst_39 = arith.constant 1.000000e+00 : f32
    %238 = vector.broadcast %cst_39 : f32 to vector<8x48xf32>
    %239 = arith.addf %238, %237 : vector<8x48xf32>
    %240 = arith.divf %238, %239 : vector<8x48xf32>
    %241 = vector.extract_strided_slice %234 {offsets = [0, 48], sizes = [8, 16], strides = [1, 1]} : vector<8x64xf32> to vector<8x16xf32>
    %242 = math.tanh %241 : vector<8x16xf32>
    %243 = vector.extract_strided_slice %240 {offsets = [0, 0], sizes = [8, 16], strides = [1, 1]} : vector<8x48xf32> to vector<8x16xf32>
    %244 = vector.extract_strided_slice %240 {offsets = [0, 16], sizes = [8, 16], strides = [1, 1]} : vector<8x48xf32> to vector<8x16xf32>
    %245 = vector.extract_strided_slice %240 {offsets = [0, 32], sizes = [8, 16], strides = [1, 1]} : vector<8x48xf32> to vector<8x16xf32>
    %246 = arith.mulf %244, %209 : vector<8x16xf32>
    %247 = arith.mulf %243, %242 : vector<8x16xf32>
    %248 = arith.addf %246, %247 : vector<8x16xf32>
    %249 = math.tanh %248 : vector<8x16xf32>
    %250 = arith.mulf %245, %249 : vector<8x16xf32>
    %251 = vector.extract_strided_slice %12 {offsets = [6, 0, 0], sizes = [1, 8, 128], strides = [1, 1, 1]} : vector<8x8x128xf32> to vector<1x8x128xf32>
    %252 = vector.shape_cast %251 : vector<1x8x128xf32> to vector<8x128xf32>
    %cst_40 = arith.constant dense<0.000000e+00> : vector<8x128xf32>
    %253 = tpu.matmul %231, %0, %cst_40 {dimension_numbers = #tpu.dot_dimension_numbers<[1], [0], [0], [1], [0, 0, 1, 1], [], []>} : vector<8x32xf32>, vector<32x128xf32>, vector<8x128xf32> -> vector<8x128xf32>
    %254 = arith.addf %252, %253 : vector<8x128xf32>
    %255 = vector.extract_strided_slice %254 {offsets = [0, 0], sizes = [8, 96], strides = [1, 1]} : vector<8x128xf32> to vector<8x96xf32>
    %256 = arith.negf %255 : vector<8x96xf32>
    %257 = math.exp %256 : vector<8x96xf32>
    %cst_41 = arith.constant 1.000000e+00 : f32
    %258 = vector.broadcast %cst_41 : f32 to vector<8x96xf32>
    %259 = arith.addf %258, %257 : vector<8x96xf32>
    %260 = arith.divf %258, %259 : vector<8x96xf32>
    %261 = vector.extract_strided_slice %254 {offsets = [0, 96], sizes = [8, 32], strides = [1, 1]} : vector<8x128xf32> to vector<8x32xf32>
    %262 = math.tanh %261 : vector<8x32xf32>
    %263 = vector.extract_strided_slice %260 {offsets = [0, 0], sizes = [8, 32], strides = [1, 1]} : vector<8x96xf32> to vector<8x32xf32>
    %264 = vector.extract_strided_slice %260 {offsets = [0, 32], sizes = [8, 32], strides = [1, 1]} : vector<8x96xf32> to vector<8x32xf32>
    %265 = vector.extract_strided_slice %260 {offsets = [0, 64], sizes = [8, 32], strides = [1, 1]} : vector<8x96xf32> to vector<8x32xf32>
    %266 = arith.mulf %264, %229 : vector<8x32xf32>
    %267 = arith.mulf %263, %262 : vector<8x32xf32>
    %268 = arith.addf %266, %267 : vector<8x32xf32>
    %269 = math.tanh %268 : vector<8x32xf32>
    %270 = arith.mulf %265, %269 : vector<8x32xf32>
    %271 = tpu.concatenate %270, %250 in 1 : vector<8x32xf32>, vector<8x16xf32> -> vector<8x48xf32>
    %cst_42 = arith.constant dense<0.000000e+00> : vector<8x64xf32>
    %272 = tpu.matmul %271, %1, %cst_42 {dimension_numbers = #tpu.dot_dimension_numbers<[1], [0], [0], [1], [0, 0, 1, 1], [], []>} : vector<8x48xf32>, vector<48x64xf32>, vector<8x64xf32> -> vector<8x64xf32>
    %273 = arith.addf %272, %4 : vector<8x64xf32>
    %274 = vector.extract_strided_slice %273 {offsets = [0, 0], sizes = [8, 48], strides = [1, 1]} : vector<8x64xf32> to vector<8x48xf32>
    %275 = arith.negf %274 : vector<8x48xf32>
    %276 = math.exp %275 : vector<8x48xf32>
    %cst_43 = arith.constant 1.000000e+00 : f32
    %277 = vector.broadcast %cst_43 : f32 to vector<8x48xf32>
    %278 = arith.addf %277, %276 : vector<8x48xf32>
    %279 = arith.divf %277, %278 : vector<8x48xf32>
    %280 = vector.extract_strided_slice %273 {offsets = [0, 48], sizes = [8, 16], strides = [1, 1]} : vector<8x64xf32> to vector<8x16xf32>
    %281 = math.tanh %280 : vector<8x16xf32>
    %282 = vector.extract_strided_slice %279 {offsets = [0, 0], sizes = [8, 16], strides = [1, 1]} : vector<8x48xf32> to vector<8x16xf32>
    %283 = vector.extract_strided_slice %279 {offsets = [0, 16], sizes = [8, 16], strides = [1, 1]} : vector<8x48xf32> to vector<8x16xf32>
    %284 = vector.extract_strided_slice %279 {offsets = [0, 32], sizes = [8, 16], strides = [1, 1]} : vector<8x48xf32> to vector<8x16xf32>
    %285 = arith.mulf %283, %248 : vector<8x16xf32>
    %286 = arith.mulf %282, %281 : vector<8x16xf32>
    %287 = arith.addf %285, %286 : vector<8x16xf32>
    %288 = math.tanh %287 : vector<8x16xf32>
    %289 = arith.mulf %284, %288 : vector<8x16xf32>
    %290 = vector.extract_strided_slice %12 {offsets = [7, 0, 0], sizes = [1, 8, 128], strides = [1, 1, 1]} : vector<8x8x128xf32> to vector<1x8x128xf32>
    %291 = vector.shape_cast %290 : vector<1x8x128xf32> to vector<8x128xf32>
    %cst_44 = arith.constant dense<0.000000e+00> : vector<8x128xf32>
    %292 = tpu.matmul %270, %0, %cst_44 {dimension_numbers = #tpu.dot_dimension_numbers<[1], [0], [0], [1], [0, 0, 1, 1], [], []>} : vector<8x32xf32>, vector<32x128xf32>, vector<8x128xf32> -> vector<8x128xf32>
    %293 = arith.addf %291, %292 : vector<8x128xf32>
    %294 = vector.extract_strided_slice %293 {offsets = [0, 0], sizes = [8, 96], strides = [1, 1]} : vector<8x128xf32> to vector<8x96xf32>
    %295 = arith.negf %294 : vector<8x96xf32>
    %296 = math.exp %295 : vector<8x96xf32>
    %cst_45 = arith.constant 1.000000e+00 : f32
    %297 = vector.broadcast %cst_45 : f32 to vector<8x96xf32>
    %298 = arith.addf %297, %296 : vector<8x96xf32>
    %299 = arith.divf %297, %298 : vector<8x96xf32>
    %300 = vector.extract_strided_slice %293 {offsets = [0, 96], sizes = [8, 32], strides = [1, 1]} : vector<8x128xf32> to vector<8x32xf32>
    %301 = math.tanh %300 : vector<8x32xf32>
    %302 = vector.extract_strided_slice %299 {offsets = [0, 0], sizes = [8, 32], strides = [1, 1]} : vector<8x96xf32> to vector<8x32xf32>
    %303 = vector.extract_strided_slice %299 {offsets = [0, 32], sizes = [8, 32], strides = [1, 1]} : vector<8x96xf32> to vector<8x32xf32>
    %304 = vector.extract_strided_slice %299 {offsets = [0, 64], sizes = [8, 32], strides = [1, 1]} : vector<8x96xf32> to vector<8x32xf32>
    %305 = arith.mulf %303, %268 : vector<8x32xf32>
    %306 = arith.mulf %302, %301 : vector<8x32xf32>
    %307 = arith.addf %305, %306 : vector<8x32xf32>
    %308 = math.tanh %307 : vector<8x32xf32>
    %309 = arith.mulf %304, %308 : vector<8x32xf32>
    %310 = tpu.concatenate %309, %289 in 1 : vector<8x32xf32>, vector<8x16xf32> -> vector<8x48xf32>
    %cst_46 = arith.constant dense<0.000000e+00> : vector<8x64xf32>
    %311 = tpu.matmul %310, %1, %cst_46 {dimension_numbers = #tpu.dot_dimension_numbers<[1], [0], [0], [1], [0, 0, 1, 1], [], []>} : vector<8x48xf32>, vector<48x64xf32>, vector<8x64xf32> -> vector<8x64xf32>
    %312 = arith.addf %311, %4 : vector<8x64xf32>
    %313 = vector.extract_strided_slice %312 {offsets = [0, 0], sizes = [8, 48], strides = [1, 1]} : vector<8x64xf32> to vector<8x48xf32>
    %314 = arith.negf %313 : vector<8x48xf32>
    %315 = math.exp %314 : vector<8x48xf32>
    %cst_47 = arith.constant 1.000000e+00 : f32
    %316 = vector.broadcast %cst_47 : f32 to vector<8x48xf32>
    %317 = arith.addf %316, %315 : vector<8x48xf32>
    %318 = arith.divf %316, %317 : vector<8x48xf32>
    %319 = vector.extract_strided_slice %312 {offsets = [0, 48], sizes = [8, 16], strides = [1, 1]} : vector<8x64xf32> to vector<8x16xf32>
    %320 = math.tanh %319 : vector<8x16xf32>
    %321 = vector.extract_strided_slice %318 {offsets = [0, 0], sizes = [8, 16], strides = [1, 1]} : vector<8x48xf32> to vector<8x16xf32>
    %322 = vector.extract_strided_slice %318 {offsets = [0, 16], sizes = [8, 16], strides = [1, 1]} : vector<8x48xf32> to vector<8x16xf32>
    %323 = vector.extract_strided_slice %318 {offsets = [0, 32], sizes = [8, 16], strides = [1, 1]} : vector<8x48xf32> to vector<8x16xf32>
    %324 = arith.mulf %322, %287 : vector<8x16xf32>
    %325 = arith.mulf %321, %320 : vector<8x16xf32>
    %326 = arith.addf %324, %325 : vector<8x16xf32>
    %327 = math.tanh %326 : vector<8x16xf32>
    %328 = arith.mulf %323, %327 : vector<8x16xf32>
    %c0_48 = arith.constant 0 : index
    %c0_49 = arith.constant 0 : index
    %329 = vector.load %arg7[%c0_48, %c0_49] : memref<16x1xf32, #tpu.memory_space<vmem>>, vector<16x1xf32>
    %cst_50 = arith.constant dense<0.000000e+00> : vector<8x1xf32>
    %330 = tpu.matmul %328, %329, %cst_50 {dimension_numbers = #tpu.dot_dimension_numbers<[1], [0], [0], [1], [0, 0, 1, 1], [], []>} : vector<8x16xf32>, vector<16x1xf32>, vector<8x1xf32> -> vector<8x1xf32>
    %c0_51 = arith.constant 0 : index
    %c0_52 = arith.constant 0 : index
    %331 = vector.load %arg8[%c0_51, %c0_52] : memref<1x1xf32, #tpu.memory_space<vmem>>, vector<1x1xf32>
    %332 = vector.broadcast %331 : vector<1x1xf32> to vector<8x1xf32>
    %333 = arith.addf %330, %332 : vector<8x1xf32>
    %c0_53 = arith.constant 0 : index
    %c0_54 = arith.constant 0 : index
    %334 = vector.load %arg9[%c0_53, %c0_54] : memref<8x1xf32, #tpu.memory_space<vmem>>, vector<8x1xf32>
    tpu.vector_store %arg9[%c0_53, %c0_54], %333 {strides = array<i32>} : memref<8x1xf32, #tpu.memory_space<vmem>>, vector<8x1xf32>,
    return
  }
  func.func @transform_0(%arg0: i32) -> (i32, i32, i32) {
    %c0_i32 = arith.constant 0 : i32
    %c0_i32_0 = arith.constant 0 : i32
    %c0_i32_1 = arith.constant 0 : i32
    return %c0_i32, %arg0, %c0_i32_0 : i32, i32, i32
  }
  func.func @transform_1(%arg0: i32) -> (i32, i32) {
    %c0_i32 = arith.constant 0 : i32
    %c0_i32_0 = arith.constant 0 : i32
    %c0_i32_1 = arith.constant 0 : i32
    return %c0_i32, %c0_i32_0 : i32, i32
  }
  func.func @transform_2(%arg0: i32) -> (i32, i32) {
    %c0_i32 = arith.constant 0 : i32
    %c0_i32_0 = arith.constant 0 : i32
    %c0_i32_1 = arith.constant 0 : i32
    return %c0_i32, %c0_i32_0 : i32, i32
  }
  func.func @transform_3(%arg0: i32) -> (i32, i32) {
    %c0_i32 = arith.constant 0 : i32
    %c0_i32_0 = arith.constant 0 : i32
    %c0_i32_1 = arith.constant 0 : i32
    return %c0_i32, %c0_i32_0 : i32, i32
  }
  func.func @transform_4(%arg0: i32) -> (i32, i32) {
    %c0_i32 = arith.constant 0 : i32
    %c0_i32_0 = arith.constant 0 : i32
    %c0_i32_1 = arith.constant 0 : i32
    return %c0_i32, %c0_i32_0 : i32, i32
  }
  func.func @transform_5(%arg0: i32) -> (i32, i32) {
    %c0_i32 = arith.constant 0 : i32
    %c0_i32_0 = arith.constant 0 : i32
    %c0_i32_1 = arith.constant 0 : i32
    return %c0_i32, %c0_i32_0 : i32, i32
  }
  func.func @transform_6(%arg0: i32) -> (i32, i32) {
    %c0_i32 = arith.constant 0 : i32
    %c0_i32_0 = arith.constant 0 : i32
    %c0_i32_1 = arith.constant 0 : i32
    return %c0_i32, %c0_i32_0 : i32, i32
  }
  func.func @transform_7(%arg0: i32) -> (i32, i32) {
    %c0_i32 = arith.constant 0 : i32
    %c0_i32_0 = arith.constant 0 : i32
    %c0_i32_1 = arith.constant 0 : i32
    return %c0_i32, %c0_i32_0 : i32, i32
  }
  func.func @transform_8(%arg0: i32) -> (i32, i32) {
    %c0_i32 = arith.constant 0 : i32
    %c0_i32_0 = arith.constant 0 : i32
    return %arg0, %c0_i32 : i32, i32
  }
}

</mosaic_0001>

<llo_original>
// kernel: net_forward.1
$region0: #{net_forward.1}
  #allocation0 [shape = 'u32[]', space=smem, size = 0x4, offset = 0x4, fixed_abs, tag = 'smem constant byte address 0x4 - core index']
  #allocation1 [shape = 'u32[144,128]{1,0:T(1,128)}', space=vmem, size = 0x12000, scoped, tag = 'internal scratch']
  #allocation2 [shape = 'f32[1,1]{1,0:T(1,128)S(1)}', space=vmem, size = 0x200, scoped, tag = 'scoped memory for net_forward.1']
  %s0 = inlined_call_operand.vmem [shape: f32[8,8,7], index: 0, kind: input, shape index: {}]
  %s1 = inlined_call_operand.vmem [shape: f32[7,128], index: 1, kind: input, shape index: {}]
  %s2 = inlined_call_operand.vmem [shape: f32[32,128], index: 2, kind: input, shape index: {}]
  %s3 = inlined_call_operand.vmem [shape: f32[1,128], index: 3, kind: input, shape index: {}]
  %s4 = inlined_call_operand.vmem [shape: f32[48,64], index: 4, kind: input, shape index: {}]
  %s5 = inlined_call_operand.vmem [shape: f32[1,64], index: 5, kind: input, shape index: {}]
  %s6 = inlined_call_operand.vmem [shape: f32[16,1], index: 6, kind: input, shape index: {}]
  %s7 = inlined_call_operand.<no memory space> [shape: f32[1,1], index: 7, kind: input, shape index: {}]
  %s8 = inlined_call_operand.vmem [shape: f32[8,1], index: 8, kind: output, shape index: {}]
  %s9 = sld [smem:[#allocation0]]
  $region42: #{net_forward.1} parent=0
    _
  %s11 = ssub.s32 1, %s9
  %s12 = scalar_select 0, %s11, %s9
  %v13 = vstv %s7
  %14 = vst [vmem:[#allocation2] sm:$0x1] %v13
  // Predicated region
  $region2: #{net_forward.1} parent=0 // pred_check
    _
  $region3: #{net_forward.1} parent=0 // pred_check_branch
    %16 = sbr.rel (0) target = $region5
  $region4: #{net_forward.1} parent=0 // pred_region
    _
  $region5: #{net_forward.1} parent=0 // pred_fallthru
    _
  // Predicated region
  $region6: #{net_forward.1} parent=0 // pred_check
    _
  $region7: #{net_forward.1} parent=0 // pred_check_branch
    %18 = sbr.rel (0) target = $region9
  $region8: #{net_forward.1} parent=0 // pred_region
    _
  $region9: #{net_forward.1} parent=0 // pred_fallthru
    _
  // Predicated region
  $region10: #{net_forward.1} parent=0 // pred_check
    _
  $region11: #{net_forward.1} parent=0 // pred_check_branch
    %20 = sbr.rel (0) target = $region13
  $region12: #{net_forward.1} parent=0 // pred_region
    _
  $region13: #{net_forward.1} parent=0 // pred_fallthru
    _
  // Predicated region
  $region14: #{net_forward.1} parent=0 // pred_check
    _
  $region15: #{net_forward.1} parent=0 // pred_check_branch
    %22 = sbr.rel (0) target = $region17
  $region16: #{net_forward.1} parent=0 // pred_region
    _
  $region17: #{net_forward.1} parent=0 // pred_fallthru
    _
  // Predicated region
  $region18: #{net_forward.1} parent=0 // pred_check
    _
  $region19: #{net_forward.1} parent=0 // pred_check_branch
    %24 = sbr.rel (0) target = $region21
  $region20: #{net_forward.1} parent=0 // pred_region
    _
  $region21: #{net_forward.1} parent=0 // pred_fallthru
    _
  // Predicated region
  $region22: #{net_forward.1} parent=0 // pred_check
    _
  $region23: #{net_forward.1} parent=0 // pred_check_branch
    %26 = sbr.rel (0) target = $region25
  $region24: #{net_forward.1} parent=0 // pred_region
    _
  $region25: #{net_forward.1} parent=0 // pred_fallthru
    _
  // Predicated region
  $region26: #{net_forward.1} parent=0 // pred_check
    _
  $region27: #{net_forward.1} parent=0 // pred_check_branch
    %28 = sbr.rel (0) target = $region29
  $region28: #{net_forward.1} parent=0 // pred_region
    _
  $region29: #{net_forward.1} parent=0 // pred_fallthru
    _
  // Predicated region
  $region30: #{net_forward.1} parent=0 // pred_check
    _
  $region31: #{net_forward.1} parent=0 // pred_check_branch
    %30 = sbr.rel (0) target = $region33
  $region32: #{net_forward.1} parent=0 // pred_region
    _
  $region33: #{net_forward.1} parent=0 // pred_fallthru
    _
  %v31 = vld [vmem:[%s2] sm:$0xff]
  %v32 = vld [vmem:[%s2 + $0x8] sm:$0xff]
  %v33 = vld [vmem:[%s2 + $0x10] sm:$0xff]
  %v34 = vld [vmem:[%s2 + $0x18] sm:$0xff]
  %v35 = vld [vmem:[%s4] sm:$0xff]
  %v36 = vld [vmem:[%s4 + $0x8] sm:$0xff]
  %v37 = vld [vmem:[%s4 + $0x10] sm:$0xff]
  %v38 = vld [vmem:[%s4 + $0x18] sm:$0xff]
  %v39 = vld [vmem:[%s4 + $0x20] sm:$0xff]
  %v40 = vld [vmem:[%s4 + $0x28] sm:$0xff]
  %v41 = vld [vmem:[%s5] sm:$0x1]
  %v43 = vlaneseq
  %v44 = vshrl.u32 %v43, 7
  %v45 = vsub.s32 0, %v44
  %v46 = vrot.slane %v41, %v45
  %v48 = vld [vmem:[%s0] sm:$0xff]
  %v49 = vld [vmem:[%s0 + $0x8] sm:$0xff]
  %v50 = vld [vmem:[%s0 + $0x10] sm:$0xff]
  %v51 = vld [vmem:[%s0 + $0x18] sm:$0xff]
  %v52 = vld [vmem:[%s0 + $0x20] sm:$0xff]
  %v53 = vld [vmem:[%s0 + $0x28] sm:$0xff]
  %v54 = vld [vmem:[%s0 + $0x30] sm:$0xff]
  %v55 = vld [vmem:[%s0 + $0x38] sm:$0xff]
  %v56 = vld [vmem:[%s1] sm:$0x7f]
  %v57 = vld [vmem:[%s3] sm:$0x1]
  %v59 = vlaneseq
  %v60 = vshrl.u32 %v59, 7
  %v61 = vsub.s32 0, %v60
  %v62 = vrot.slane %v57, %v61
  %vm64 = vcmask 56320
  %v66 = vsel %vm64, %v48, 0
  %v69 = vsel %vm64, %v49, 0
  %v72 = vsel %vm64, %v50, 0
  %v75 = vsel %vm64, %v51, 0
  %v78 = vsel %vm64, %v52, 0
  %v81 = vsel %vm64, %v53, 0
  %v84 = vsel %vm64, %v54, 0
  %v87 = vsel %vm64, %v55, 0
  %vm89 = vcmask 1046528
  %v91 = vsel %vm89, %v56, 0
  %93 = vmatprep.subr.mxu0 0.0
  %94 = vmatpush1.msra.mxu0 0.0
  %95 = vmatprep.subr.mxu0 0.0
  %96 = vmatpush1.msra.mxu0 0.0
  %97 = vmatprep.subr.mxu0 0.0
  %98 = vmatpush1.msra.mxu0 0.0
  %99 = vmatprep.subr.mxu0 0.0
  %100 = vmatpush1.msra.mxu0 0.0
  %101 = vmatprep.subr.mxu0 0.0
  %102 = vmatpush1.msra.mxu0 0.0
  %103 = vmatprep.subr.mxu0 0.0
  %104 = vmatpush1.msra.mxu0 0.0
  %105 = vmatprep.subr.mxu0 0.0
  %106 = vmatpush1.msra.mxu0 0.0
  %107 = vmatprep.subr.mxu0 0.0
  %108 = vmatpush1.msra.mxu0 0.0
  %109 = vmatprep.subr.mxu0 0.0
  %110 = vmatpush1.msra.mxu0 0.0
  %111 = vmatprep.subr.mxu0 0.0
  %112 = vmatpush1.msra.mxu0 0.0
  %113 = vmatprep.subr.mxu0 0.0
  %114 = vmatpush1.msra.mxu0 0.0
  %115 = vmatprep.subr.mxu0 0.0
  %116 = vmatpush1.msra.mxu0 0.0
  %117 = vmatprep.subr.mxu0 0.0
  %118 = vmatpush1.msra.mxu0 0.0
  %119 = vmatprep.subr.mxu0 0.0
  %120 = vmatpush1.msra.mxu0 0.0
  %121 = vmatprep.subr.mxu0 0.0
  %122 = vmatpush1.msra.mxu0 0.0
  %123 = vmatprep.subr.mxu0 0.0
  %124 = vmatpush1.msra.mxu0 %v91
  %125 = vmatprep.subr.mxu0 0.0
  %126 = vmatpush2.msra.mxu0 0.0
  %127 = vmatprep.subr.mxu0 0.0
  %128 = vmatpush2.msra.mxu0 0.0
  %129 = vmatprep.subr.mxu0 0.0
  %130 = vmatpush2.msra.mxu0 0.0
  %131 = vmatprep.subr.mxu0 0.0
  %132 = vmatpush2.msra.mxu0 0.0
  %133 = vmatprep.subr.mxu0 0.0
  %134 = vmatpush2.msra.mxu0 0.0
  %135 = vmatprep.subr.mxu0 0.0
  %136 = vmatpush2.msra.mxu0 0.0
  %137 = vmatprep.subr.mxu0 0.0
  %138 = vmatpush2.msra.mxu0 0.0
  %139 = vmatprep.subr.mxu0 0.0
  %140 = vmatpush2.msra.mxu0 0.0
  %141 = vmatprep.subr.mxu0 0.0
  %142 = vmatpush2.msra.mxu0 0.0
  %143 = vmatprep.subr.mxu0 0.0
  %144 = vmatpush2.msra.mxu0 0.0
  %145 = vmatprep.subr.mxu0 0.0
  %146 = vmatpush2.msra.mxu0 0.0
  %147 = vmatprep.subr.mxu0 0.0
  %148 = vmatpush2.msra.mxu0 0.0
  %149 = vmatprep.subr.mxu0 0.0
  %150 = vmatpush2.msra.mxu0 0.0
  %151 = vmatprep.subr.mxu0 0.0
  %152 = vmatpush2.msra.mxu0 0.0
  %153 = vmatprep.subr.mxu0 0.0
  %154 = vmatpush2.msra.mxu0 0.0
  %155 = vmatprep.subr.mxu0 0.0
  %156 = vmatpush2.msra.mxu0 0.0
  %157 = vmatprep.mubr.f32.mxu0 0.0
  %158 = vmatmul.mubr.f32.gmra.mxu0 %v66
  %v159 = vpop.f32.mrf.mxu0
  %v160 = vadd.f32 %v62, %v159
  %v161 = vpop.f32.mrf.mxu0
  %162 = vmatprep.mubr.f32.mxu0 0.0
  %163 = vmatmul.mubr.f32.gmra.mxu0 %v69
  %v164 = vpop.f32.mrf.mxu0
  %v165 = vadd.f32 %v62, %v164
  %v166 = vpop.f32.mrf.mxu0
  %167 = vmatprep.mubr.f32.mxu0 0.0
  %168 = vmatmul.mubr.f32.gmra.mxu0 %v72
  %v169 = vpop.f32.mrf.mxu0
  %v170 = vadd.f32 %v62, %v169
  %v171 = vpop.f32.mrf.mxu0
  %172 = vmatprep.mubr.f32.mxu0 0.0
  %173 = vmatmul.mubr.f32.gmra.mxu0 %v75
  %v174 = vpop.f32.mrf.mxu0
  %v175 = vadd.f32 %v62, %v174
  %v176 = vpop.f32.mrf.mxu0
  %177 = vmatprep.mubr.f32.mxu0 0.0
  %178 = vmatmul.mubr.f32.gmra.mxu0 %v78
  %v179 = vpop.f32.mrf.mxu0
  %v180 = vadd.f32 %v62, %v179
  %v181 = vpop.f32.mrf.mxu0
  %182 = vmatprep.mubr.f32.mxu0 0.0
  %183 = vmatmul.mubr.f32.gmra.mxu0 %v81
  %v184 = vpop.f32.mrf.mxu0
  %v185 = vadd.f32 %v62, %v184
  %v186 = vpop.f32.mrf.mxu0
  %187 = vmatprep.mubr.f32.mxu0 0.0
  %188 = vmatmul.mubr.f32.gmra.mxu0 %v84
  %v189 = vpop.f32.mrf.mxu0
  %v190 = vadd.f32 %v62, %v189
  %v191 = vpop.f32.mrf.mxu0
  %192 = vmatprep.mubr.f32.mxu0 0.0
  %193 = vmatmul.mubr.f32.gmra.mxu0 %v87
  %v194 = vpop.f32.mrf.mxu0
  %v195 = vadd.f32 %v62, %v194
  %v196 = vpop.f32.mrf.mxu0
  %197 = vdwg.mxu0
  %vm198 = vcmask 261120
  %v200 = vsel %vm198, 0.0, 0
  %202 = vmatprep.subr.mxu0 0.0
  %203 = vmatpush1.msra.mxu0 0.0
  %204 = vmatprep.subr.mxu0 0.0
  %205 = vmatpush1.msra.mxu0 0.0
  %206 = vmatprep.subr.mxu0 0.0
  %207 = vmatpush1.msra.mxu0 0.0
  %208 = vmatprep.subr.mxu0 0.0
  %209 = vmatpush1.msra.mxu0 0.0
  %210 = vmatprep.subr.mxu0 0.0
  %211 = vmatpush1.msra.mxu0 0.0
  %212 = vmatprep.subr.mxu0 0.0
  %213 = vmatpush1.msra.mxu0 0.0
  %214 = vmatprep.subr.mxu0 0.0
  %215 = vmatpush1.msra.mxu0 0.0
  %216 = vmatprep.subr.mxu0 0.0
  %217 = vmatpush1.msra.mxu0 0.0
  %218 = vmatprep.subr.mxu0 0.0
  %219 = vmatpush1.msra.mxu0 0.0
  %220 = vmatprep.subr.mxu0 0.0
  %221 = vmatpush1.msra.mxu0 0.0
  %222 = vmatprep.subr.mxu0 0.0
  %223 = vmatpush1.msra.mxu0 0.0
  %224 = vmatprep.subr.mxu0 0.0
  %225 = vmatpush1.msra.mxu0 0.0
  %226 = vmatprep.subr.mxu0 0.0
  %227 = vmatpush1.msra.mxu0 %v34
  %228 = vmatprep.subr.mxu0 0.0
  %229 = vmatpush1.msra.mxu0 %v33
  %230 = vmatprep.subr.mxu0 0.0
  %231 = vmatpush1.msra.mxu0 %v32
  %232 = vmatprep.subr.mxu0 0.0
  %233 = vmatpush1.msra.mxu0 %v31
  %234 = vmatprep.subr.mxu0 0.0
  %235 = vmatpush2.msra.mxu0 0.0
  %236 = vmatprep.subr.mxu0 0.0
  %237 = vmatpush2.msra.mxu0 0.0
  %238 = vmatprep.subr.mxu0 0.0
  %239 = vmatpush2.msra.mxu0 0.0
  %240 = vmatprep.subr.mxu0 0.0
  %241 = vmatpush2.msra.mxu0 0.0
  %242 = vmatprep.subr.mxu0 0.0
  %243 = vmatpush2.msra.mxu0 0.0
  %244 = vmatprep.subr.mxu0 0.0
  %245 = vmatpush2.msra.mxu0 0.0
  %246 = vmatprep.subr.mxu0 0.0
  %247 = vmatpush2.msra.mxu0 0.0
  %248 = vmatprep.subr.mxu0 0.0
  %249 = vmatpush2.msra.mxu0 0.0
  %250 = vmatprep.subr.mxu0 0.0
  %251 = vmatpush2.msra.mxu0 0.0
  %252 = vmatprep.subr.mxu0 0.0
  %253 = vmatpush2.msra.mxu0 0.0
  %254 = vmatprep.subr.mxu0 0.0
  %255 = vmatpush2.msra.mxu0 0.0
  %256 = vmatprep.subr.mxu0 0.0
  %257 = vmatpush2.msra.mxu0 0.0
  %258 = vmatprep.subr.mxu0 0.0
  %259 = vmatpush2.msra.mxu0 0.0
  %260 = vmatprep.subr.mxu0 0.0
  %261 = vmatpush2.msra.mxu0 0.0
  %262 = vmatprep.subr.mxu0 0.0
  %263 = vmatpush2.msra.mxu0 0.0
  %264 = vmatprep.subr.mxu0 0.0
  %265 = vmatpush2.msra.mxu0 0.0
  %266 = vmatprep.mubr.f32.mxu0 0.0
  %267 = vmatmul.mubr.f32.gmra.mxu0 %v200
  %v268 = vpop.f32.mrf.mxu0
  %v269 = vadd.f32 0.0, %v268
  %v270 = vpop.f32.mrf.mxu0
  %271 = vdwg.mxu0
  %v272 = vadd.f32 %v160, %v269
  %v273 = vxor.u32 %v272, 2147483648
  %v274 = vmul.f32 %v273, 1.442695
  %v275 = vpow.pop %v274
  %v276 = vadd.f32 %v275, 1.0
  %v277 = vrcp.pop %v276
  %v278 = vmul.f32 1.0, %v277
  %v279 = vtanh.pop %v272
  %v280 = vmul.f32 %v278, 0.0
  %282 = vrot.lane.b32.xlu0 %v279, 32
  %v283 = vpop.permute.xlu0 %282
  %v285 = vmul.f32 %v278, %v283
  %287 = vrot.lane.b32.xlu0 %v285, 32
  %v288 = vpop.permute.xlu0 %287
  %v290 = vadd.f32 %v280, %v288
  %v291 = vtanh.pop %v290
  %293 = vrot.lane.b32.xlu0 %v291, 32
  %v294 = vpop.permute.xlu0 %293
  %v296 = vmul.f32 %v278, %v294
  %298 = vrot.lane.b32.xlu0 %v296, 64
  %v299 = vpop.permute.xlu0 %298
  %v301 = vsel %vm198, %v299, 0.0
  %vm302 = vcmask 392192
  %v304 = vsel %vm302, %v301, 0
  %306 = vmatprep.subr.mxu0 0.0
  %307 = vmatpush1.msra.mxu0 0.0
  %308 = vmatprep.subr.mxu0 0.0
  %309 = vmatpush1.msra.mxu0 0.0
  %310 = vmatprep.subr.mxu0 0.0
  %311 = vmatpush1.msra.mxu0 0.0
  %312 = vmatprep.subr.mxu0 0.0
  %313 = vmatpush1.msra.mxu0 0.0
  %314 = vmatprep.subr.mxu0 0.0
  %315 = vmatpush1.msra.mxu0 0.0
  %316 = vmatprep.subr.mxu0 0.0
  %317 = vmatpush1.msra.mxu0 0.0
  %318 = vmatprep.subr.mxu0 0.0
  %319 = vmatpush1.msra.mxu0 0.0
  %320 = vmatprep.subr.mxu0 0.0
  %321 = vmatpush1.msra.mxu0 0.0
  %322 = vmatprep.subr.mxu0 0.0
  %323 = vmatpush1.msra.mxu0 0.0
  %324 = vmatprep.subr.mxu0 0.0
  %325 = vmatpush1.msra.mxu0 0.0
  %326 = vmatprep.subr.mxu0 0.0
  %327 = vmatpush1.msra.mxu0 %v40
  %328 = vmatprep.subr.mxu0 0.0
  %329 = vmatpush1.msra.mxu0 %v39
  %330 = vmatprep.subr.mxu0 0.0
  %331 = vmatpush1.msra.mxu0 %v38
  %332 = vmatprep.subr.mxu0 0.0
  %333 = vmatpush1.msra.mxu0 %v37
  %334 = vmatprep.subr.mxu0 0.0
  %335 = vmatpush1.msra.mxu0 %v36
  %336 = vmatprep.subr.mxu0 0.0
  %337 = vmatpush1.msra.mxu0 %v35
  %338 = vmatprep.subr.mxu0 0.0
  %339 = vmatpush2.msra.mxu0 0.0
  %340 = vmatprep.subr.mxu0 0.0
  %341 = vmatpush2.msra.mxu0 0.0
  %342 = vmatprep.subr.mxu0 0.0
  %343 = vmatpush2.msra.mxu0 0.0
  %344 = vmatprep.subr.mxu0 0.0
  %345 = vmatpush2.msra.mxu0 0.0
  %346 = vmatprep.subr.mxu0 0.0
  %347 = vmatpush2.msra.mxu0 0.0
  %348 = vmatprep.subr.mxu0 0.0
  %349 = vmatpush2.msra.mxu0 0.0
  %350 = vmatprep.subr.mxu0 0.0
  %351 = vmatpush2.msra.mxu0 0.0
  %352 = vmatprep.subr.mxu0 0.0
  %353 = vmatpush2.msra.mxu0 0.0
  %354 = vmatprep.subr.mxu0 0.0
  %355 = vmatpush2.msra.mxu0 0.0
  %356 = vmatprep.subr.mxu0 0.0
  %357 = vmatpush2.msra.mxu0 0.0
  %358 = vmatprep.subr.mxu0 0.0
  %359 = vmatpush2.msra.mxu0 0.0
  %360 = vmatprep.subr.mxu0 0.0
  %361 = vmatpush2.msra.mxu0 0.0
  %362 = vmatprep.subr.mxu0 0.0
  %363 = vmatpush2.msra.mxu0 0.0
  %364 = vmatprep.subr.mxu0 0.0
  %365 = vmatpush2.msra.mxu0 0.0
  %366 = vmatprep.subr.mxu0 0.0
  %367 = vmatpush2.msra.mxu0 0.0
  %368 = vmatprep.subr.mxu0 0.0
  %369 = vmatpush2.msra.mxu0 0.0
  %370 = vmatprep.mubr.f32.mxu0 0.0
  %371 = vmatmul.mubr.f32.gmra.mxu0 %v304
  %v372 = vpop.f32.mrf.mxu0
  %v373 = vadd.f32 %v46, %v372
  %v374 = vpop.f32.mrf.mxu0
  %375 = vdwg.mxu0
  %v376 = vxor.u32 %v373, 2147483648
  %v377 = vmul.f32 %v376, 1.442695
  %v378 = vpow.pop %v377
  %v379 = vadd.f32 %v378, 1.0
  %v380 = vrcp.pop %v379
  %v381 = vmul.f32 1.0, %v380
  %v382 = vtanh.pop %v373
  %v383 = vmul.f32 %v381, 0.0
  %385 = vrot.lane.b32.xlu0 %v382, 80
  %v386 = vpop.permute.xlu0 %385
  %v388 = vmul.f32 %v381, %v386
  %390 = vrot.lane.b32.xlu0 %v388, 16
  %v391 = vpop.permute.xlu0 %390
  %v393 = vadd.f32 %v383, %v391
  %v394 = vtanh.pop %v393
  %396 = vrot.lane.b32.xlu0 %v394, 16
  %v397 = vpop.permute.xlu0 %396
  %v399 = vmul.f32 %v381, %v397
  %v400 = vsel %vm198, %v299, 0
  %402 = vmatprep.subr.mxu0 0.0
  %403 = vmatpush1.msra.mxu0 0.0
  %404 = vmatprep.subr.mxu0 0.0
  %405 = vmatpush1.msra.mxu0 0.0
  %406 = vmatprep.subr.mxu0 0.0
  %407 = vmatpush1.msra.mxu0 0.0
  %408 = vmatprep.subr.mxu0 0.0
  %409 = vmatpush1.msra.mxu0 0.0
  %410 = vmatprep.subr.mxu0 0.0
  %411 = vmatpush1.msra.mxu0 0.0
  %412 = vmatprep.subr.mxu0 0.0
  %413 = vmatpush1.msra.mxu0 0.0
  %414 = vmatprep.subr.mxu0 0.0
  %415 = vmatpush1.msra.mxu0 0.0
  %416 = vmatprep.subr.mxu0 0.0
  %417 = vmatpush1.msra.mxu0 0.0
  %418 = vmatprep.subr.mxu0 0.0
  %419 = vmatpush1.msra.mxu0 0.0
  %420 = vmatprep.subr.mxu0 0.0
  %421 = vmatpush1.msra.mxu0 0.0
  %422 = vmatprep.subr.mxu0 0.0
  %423 = vmatpush1.msra.mxu0 0.0
  %424 = vmatprep.subr.mxu0 0.0
  %425 = vmatpush1.msra.mxu0 0.0
  %426 = vmatprep.subr.mxu0 0.0
  %427 = vmatpush1.msra.mxu0 %v34
  %428 = vmatprep.subr.mxu0 0.0
  %429 = vmatpush1.msra.mxu0 %v33
  %430 = vmatprep.subr.mxu0 0.0
  %431 = vmatpush1.msra.mxu0 %v32
  %432 = vmatprep.subr.mxu0 0.0
  %433 = vmatpush1.msra.mxu0 %v31
  %434 = vmatprep.subr.mxu0 0.0
  %435 = vmatpush2.msra.mxu0 0.0
  %436 = vmatprep.subr.mxu0 0.0
  %437 = vmatpush2.msra.mxu0 0.0
  %438 = vmatprep.subr.mxu0 0.0
  %439 = vmatpush2.msra.mxu0 0.0
  %440 = vmatprep.subr.mxu0 0.0
  %441 = vmatpush2.msra.mxu0 0.0
  %442 = vmatprep.subr.mxu0 0.0
  %443 = vmatpush2.msra.mxu0 0.0
  %444 = vmatprep.subr.mxu0 0.0
  %445 = vmatpush2.msra.mxu0 0.0
  %446 = vmatprep.subr.mxu0 0.0
  %447 = vmatpush2.msra.mxu0 0.0
  %448 = vmatprep.subr.mxu0 0.0
  %449 = vmatpush2.msra.mxu0 0.0
  %450 = vmatprep.subr.mxu0 0.0
  %451 = vmatpush2.msra.mxu0 0.0
  %452 = vmatprep.subr.mxu0 0.0
  %453 = vmatpush2.msra.mxu0 0.0
  %454 = vmatprep.subr.mxu0 0.0
  %455 = vmatpush2.msra.mxu0 0.0
  %456 = vmatprep.subr.mxu0 0.0
  %457 = vmatpush2.msra.mxu0 0.0
  %458 = vmatprep.subr.mxu0 0.0
  %459 = vmatpush2.msra.mxu0 0.0
  %460 = vmatprep.subr.mxu0 0.0
  %461 = vmatpush2.msra.mxu0 0.0
  %462 = vmatprep.subr.mxu0 0.0
  %463 = vmatpush2.msra.mxu0 0.0
  %464 = vmatprep.subr.mxu0 0.0
  %465 = vmatpush2.msra.mxu0 0.0
  %466 = vmatprep.mubr.f32.mxu0 0.0
  %467 = vmatmul.mubr.f32.gmra.mxu0 %v400
  %v468 = vpop.f32.mrf.mxu0
  %v469 = vadd.f32 0.0, %v468
  %v470 = vpop.f32.mrf.mxu0
  %471 = vdwg.mxu0
  %v472 = vadd.f32 %v165, %v469
  %v473 = vxor.u32 %v472, 2147483648
  %v474 = vmul.f32 %v473, 1.442695
  %v475 = vpow.pop %v474
  %v476 = vadd.f32 %v475, 1.0
  %v477 = vrcp.pop %v476
  %v478 = vmul.f32 1.0, %v477
  %v479 = vtanh.pop %v472
  %v480 = vmul.f32 %v478, %v290
  %482 = vrot.lane.b32.xlu0 %v479, 32
  %v483 = vpop.permute.xlu0 %482
  %v485 = vmul.f32 %v478, %v483
  %487 = vrot.lane.b32.xlu0 %v485, 32
  %v488 = vpop.permute.xlu0 %487
  %v490 = vadd.f32 %v480, %v488
  %v491 = vtanh.pop %v490
  %493 = vrot.lane.b32.xlu0 %v491, 32
  %v494 = vpop.permute.xlu0 %493
  %v496 = vmul.f32 %v478, %v494
  %498 = vrot.lane.b32.xlu0 %v496, 64
  %v499 = vpop.permute.xlu0 %498
  %v501 = vsel %vm198, %v499, %v399
  %v503 = vsel %vm302, %v501, 0
  %505 = vmatprep.subr.mxu0 0.0
  %506 = vmatpush1.msra.mxu0 0.0
  %507 = vmatprep.subr.mxu0 0.0
  %508 = vmatpush1.msra.mxu0 0.0
  %509 = vmatprep.subr.mxu0 0.0
  %510 = vmatpush1.msra.mxu0 0.0
  %511 = vmatprep.subr.mxu0 0.0
  %512 = vmatpush1.msra.mxu0 0.0
  %513 = vmatprep.subr.mxu0 0.0
  %514 = vmatpush1.msra.mxu0 0.0
  %515 = vmatprep.subr.mxu0 0.0
  %516 = vmatpush1.msra.mxu0 0.0
  %517 = vmatprep.subr.mxu0 0.0
  %518 = vmatpush1.msra.mxu0 0.0
  %519 = vmatprep.subr.mxu0 0.0
  %520 = vmatpush1.msra.mxu0 0.0
  %521 = vmatprep.subr.mxu0 0.0
  %522 = vmatpush1.msra.mxu0 0.0
  %523 = vmatprep.subr.mxu0 0.0
  %524 = vmatpush1.msra.mxu0 0.0
  %525 = vmatprep.subr.mxu0 0.0
  %526 = vmatpush1.msra.mxu0 %v40
  %527 = vmatprep.subr.mxu0 0.0
  %528 = vmatpush1.msra.mxu0 %v39
  %529 = vmatprep.subr.mxu0 0.0
  %530 = vmatpush1.msra.mxu0 %v38
  %531 = vmatprep.subr.mxu0 0.0
  %532 = vmatpush1.msra.mxu0 %v37
  %533 = vmatprep.subr.mxu0 0.0
  %534 = vmatpush1.msra.mxu0 %v36
  %535 = vmatprep.subr.mxu0 0.0
  %536 = vmatpush1.msra.mxu0 %v35
  %537 = vmatprep.subr.mxu0 0.0
  %538 = vmatpush2.msra.mxu0 0.0
  %539 = vmatprep.subr.mxu0 0.0
  %540 = vmatpush2.msra.mxu0 0.0
  %541 = vmatprep.subr.mxu0 0.0
  %542 = vmatpush2.msra.mxu0 0.0
  %543 = vmatprep.subr.mxu0 0.0
  %544 = vmatpush2.msra.mxu0 0.0
  %545 = vmatprep.subr.mxu0 0.0
  %546 = vmatpush2.msra.mxu0 0.0
  %547 = vmatprep.subr.mxu0 0.0
  %548 = vmatpush2.msra.mxu0 0.0
  %549 = vmatprep.subr.mxu0 0.0
  %550 = vmatpush2.msra.mxu0 0.0
  %551 = vmatprep.subr.mxu0 0.0
  %552 = vmatpush2.msra.mxu0 0.0
  %553 = vmatprep.subr.mxu0 0.0
  %554 = vmatpush2.msra.mxu0 0.0
  %555 = vmatprep.subr.mxu0 0.0
  %556 = vmatpush2.msra.mxu0 0.0
  %557 = vmatprep.subr.mxu0 0.0
  %558 = vmatpush2.msra.mxu0 0.0
  %559 = vmatprep.subr.mxu0 0.0
  %560 = vmatpush2.msra.mxu0 0.0
  %561 = vmatprep.subr.mxu0 0.0
  %562 = vmatpush2.msra.mxu0 0.0
  %563 = vmatprep.subr.mxu0 0.0
  %564 = vmatpush2.msra.mxu0 0.0
  %565 = vmatprep.subr.mxu0 0.0
  %566 = vmatpush2.msra.mxu0 0.0
  %567 = vmatprep.subr.mxu0 0.0
  %568 = vmatpush2.msra.mxu0 0.0
  %569 = vmatprep.mubr.f32.mxu0 0.0
  %570 = vmatmul.mubr.f32.gmra.mxu0 %v503
  %v571 = vpop.f32.mrf.mxu0
  %v572 = vadd.f32 %v46, %v571
  %v573 = vpop.f32.mrf.mxu0
  %574 = vdwg.mxu0
  %v575 = vxor.u32 %v572, 2147483648
  %v576 = vmul.f32 %v575, 1.442695
  %v577 = vpow.pop %v576
  %v578 = vadd.f32 %v577, 1.0
  %v579 = vrcp.pop %v578
  %v580 = vmul.f32 1.0, %v579
  %v581 = vtanh.pop %v572
  %v582 = vmul.f32 %v580, %v393
  %584 = vrot.lane.b32.xlu0 %v581, 80
  %v585 = vpop.permute.xlu0 %584
  %v587 = vmul.f32 %v580, %v585
  %589 = vrot.lane.b32.xlu0 %v587, 16
  %v590 = vpop.permute.xlu0 %589
  %v592 = vadd.f32 %v582, %v590
  %v593 = vtanh.pop %v592
  %595 = vrot.lane.b32.xlu0 %v593, 16
  %v596 = vpop.permute.xlu0 %595
  %v598 = vmul.f32 %v580, %v596
  %v599 = vsel %vm198, %v499, 0
  %601 = vmatprep.subr.mxu0 0.0
  %602 = vmatpush1.msra.mxu0 0.0
  %603 = vmatprep.subr.mxu0 0.0
  %604 = vmatpush1.msra.mxu0 0.0
  %605 = vmatprep.subr.mxu0 0.0
  %606 = vmatpush1.msra.mxu0 0.0
  %607 = vmatprep.subr.mxu0 0.0
  %608 = vmatpush1.msra.mxu0 0.0
  %609 = vmatprep.subr.mxu0 0.0
  %610 = vmatpush1.msra.mxu0 0.0
  %611 = vmatprep.subr.mxu0 0.0
  %612 = vmatpush1.msra.mxu0 0.0
  %613 = vmatprep.subr.mxu0 0.0
  %614 = vmatpush1.msra.mxu0 0.0
  %615 = vmatprep.subr.mxu0 0.0
  %616 = vmatpush1.msra.mxu0 0.0
  %617 = vmatprep.subr.mxu0 0.0
  %618 = vmatpush1.msra.mxu0 0.0
  %619 = vmatprep.subr.mxu0 0.0
  %620 = vmatpush1.msra.mxu0 0.0
  %621 = vmatprep.subr.mxu0 0.0
  %622 = vmatpush1.msra.mxu0 0.0
  %623 = vmatprep.subr.mxu0 0.0
  %624 = vmatpush1.msra.mxu0 0.0
  %625 = vmatprep.subr.mxu0 0.0
  %626 = vmatpush1.msra.mxu0 %v34
  %627 = vmatprep.subr.mxu0 0.0
  %628 = vmatpush1.msra.mxu0 %v33
  %629 = vmatprep.subr.mxu0 0.0
  %630 = vmatpush1.msra.mxu0 %v32
  %631 = vmatprep.subr.mxu0 0.0
  %632 = vmatpush1.msra.mxu0 %v31
  %633 = vmatprep.subr.mxu0 0.0
  %634 = vmatpush2.msra.mxu0 0.0
  %635 = vmatprep.subr.mxu0 0.0
  %636 = vmatpush2.msra.mxu0 0.0
  %637 = vmatprep.subr.mxu0 0.0
  %638 = vmatpush2.msra.mxu0 0.0
  %639 = vmatprep.subr.mxu0 0.0
  %640 = vmatpush2.msra.mxu0 0.0
  %641 = vmatprep.subr.mxu0 0.0
  %642 = vmatpush2.msra.mxu0 0.0
  %643 = vmatprep.subr.mxu0 0.0
  %644 = vmatpush2.msra.mxu0 0.0
  %645 = vmatprep.subr.mxu0 0.0
  %646 = vmatpush2.msra.mxu0 0.0
  %647 = vmatprep.subr.mxu0 0.0
  %648 = vmatpush2.msra.mxu0 0.0
  %649 = vmatprep.subr.mxu0 0.0
  %650 = vmatpush2.msra.mxu0 0.0
  %651 = vmatprep.subr.mxu0 0.0
  %652 = vmatpush2.msra.mxu0 0.0
  %653 = vmatprep.subr.mxu0 0.0
  %654 = vmatpush2.msra.mxu0 0.0
  %655 = vmatprep.subr.mxu0 0.0
  %656 = vmatpush2.msra.mxu0 0.0
  %657 = vmatprep.subr.mxu0 0.0
  %658 = vmatpush2.msra.mxu0 0.0
  %659 = vmatprep.subr.mxu0 0.0
  %660 = vmatpush2.msra.mxu0 0.0
  %661 = vmatprep.subr.mxu0 0.0
  %662 = vmatpush2.msra.mxu0 0.0
  %663 = vmatprep.subr.mxu0 0.0
  %664 = vmatpush2.msra.mxu0 0.0
  %665 = vmatprep.mubr.f32.mxu0 0.0
  %666 = vmatmul.mubr.f32.gmra.mxu0 %v599
  %v667 = vpop.f32.mrf.mxu0
  %v668 = vadd.f32 0.0, %v667
  %v669 = vpop.f32.mrf.mxu0
  %670 = vdwg.mxu0
  %v671 = vadd.f32 %v170, %v668
  %v672 = vxor.u32 %v671, 2147483648
  %v673 = vmul.f32 %v672, 1.442695
  %v674 = vpow.pop %v673
  %v675 = vadd.f32 %v674, 1.0
  %v676 = vrcp.pop %v675
  %v677 = vmul.f32 1.0, %v676
  %v678 = vtanh.pop %v671
  %v679 = vmul.f32 %v677, %v490
  %681 = vrot.lane.b32.xlu0 %v678, 32
  %v682 = vpop.permute.xlu0 %681
  %v684 = vmul.f32 %v677, %v682
  %686 = vrot.lane.b32.xlu0 %v684, 32
  %v687 = vpop.permute.xlu0 %686
  %v689 = vadd.f32 %v679, %v687
  %v690 = vtanh.pop %v689
  %692 = vrot.lane.b32.xlu0 %v690, 32
  %v693 = vpop.permute.xlu0 %692
  %v695 = vmul.f32 %v677, %v693
  %697 = vrot.lane.b32.xlu0 %v695, 64
  %v698 = vpop.permute.xlu0 %697
  %v700 = vsel %vm198, %v698, %v598
  %v702 = vsel %vm302, %v700, 0
  %704 = vmatprep.subr.mxu0 0.0
  %705 = vmatpush1.msra.mxu0 0.0
  %706 = vmatprep.subr.mxu0 0.0
  %707 = vmatpush1.msra.mxu0 0.0
  %708 = vmatprep.subr.mxu0 0.0
  %709 = vmatpush1.msra.mxu0 0.0
  %710 = vmatprep.subr.mxu0 0.0
  %711 = vmatpush1.msra.mxu0 0.0
  %712 = vmatprep.subr.mxu0 0.0
  %713 = vmatpush1.msra.mxu0 0.0
  %714 = vmatprep.subr.mxu0 0.0
  %715 = vmatpush1.msra.mxu0 0.0
  %716 = vmatprep.subr.mxu0 0.0
  %717 = vmatpush1.msra.mxu0 0.0
  %718 = vmatprep.subr.mxu0 0.0
  %719 = vmatpush1.msra.mxu0 0.0
  %720 = vmatprep.subr.mxu0 0.0
  %721 = vmatpush1.msra.mxu0 0.0
  %722 = vmatprep.subr.mxu0 0.0
  %723 = vmatpush1.msra.mxu0 0.0
  %724 = vmatprep.subr.mxu0 0.0
  %725 = vmatpush1.msra.mxu0 %v40
  %726 = vmatprep.subr.mxu0 0.0
  %727 = vmatpush1.msra.mxu0 %v39
  %728 = vmatprep.subr.mxu0 0.0
  %729 = vmatpush1.msra.mxu0 %v38
  %730 = vmatprep.subr.mxu0 0.0
  %731 = vmatpush1.msra.mxu0 %v37
  %732 = vmatprep.subr.mxu0 0.0
  %733 = vmatpush1.msra.mxu0 %v36
  %734 = vmatprep.subr.mxu0 0.0
  %735 = vmatpush1.msra.mxu0 %v35
  %736 = vmatprep.subr.mxu0 0.0
  %737 = vmatpush2.msra.mxu0 0.0
  %738 = vmatprep.subr.mxu0 0.0
  %739 = vmatpush2.msra.mxu0 0.0
  %740 = vmatprep.subr.mxu0 0.0
  %741 = vmatpush2.msra.mxu0 0.0
  %742 = vmatprep.subr.mxu0 0.0
  %743 = vmatpush2.msra.mxu0 0.0
  %744 = vmatprep.subr.mxu0 0.0
  %745 = vmatpush2.msra.mxu0 0.0
  %746 = vmatprep.subr.mxu0 0.0
  %747 = vmatpush2.msra.mxu0 0.0
  %748 = vmatprep.subr.mxu0 0.0
  %749 = vmatpush2.msra.mxu0 0.0
  %750 = vmatprep.subr.mxu0 0.0
  %751 = vmatpush2.msra.mxu0 0.0
  %752 = vmatprep.subr.mxu0 0.0
  %753 = vmatpush2.msra.mxu0 0.0
  %754 = vmatprep.subr.mxu0 0.0
  %755 = vmatpush2.msra.mxu0 0.0
  %756 = vmatprep.subr.mxu0 0.0
  %757 = vmatpush2.msra.mxu0 0.0
  %758 = vmatprep.subr.mxu0 0.0
  %759 = vmatpush2.msra.mxu0 0.0
  %760 = vmatprep.subr.mxu0 0.0
  %761 = vmatpush2.msra.mxu0 0.0
  %762 = vmatprep.subr.mxu0 0.0
  %763 = vmatpush2.msra.mxu0 0.0
  %764 = vmatprep.subr.mxu0 0.0
  %765 = vmatpush2.msra.mxu0 0.0
  %766 = vmatprep.subr.mxu0 0.0
  %767 = vmatpush2.msra.mxu0 0.0
  %768 = vmatprep.mubr.f32.mxu0 0.0
  %769 = vmatmul.mubr.f32.gmra.mxu0 %v702
  %v770 = vpop.f32.mrf.mxu0
  %v771 = vadd.f32 %v46, %v770
  %v772 = vpop.f32.mrf.mxu0
  %773 = vdwg.mxu0
  %v774 = vxor.u32 %v771, 2147483648
  %v775 = vmul.f32 %v774, 1.442695
  %v776 = vpow.pop %v775
  %v777 = vadd.f32 %v776, 1.0
  %v778 = vrcp.pop %v777
  %v779 = vmul.f32 1.0, %v778
  %v780 = vtanh.pop %v771
  %v781 = vmul.f32 %v779, %v592
  %783 = vrot.lane.b32.xlu0 %v780, 80
  %v784 = vpop.permute.xlu0 %783
  %v786 = vmul.f32 %v779, %v784
  %788 = vrot.lane.b32.xlu0 %v786, 16
  %v789 = vpop.permute.xlu0 %788
  %v791 = vadd.f32 %v781, %v789
  %v792 = vtanh.pop %v791
  %794 = vrot.lane.b32.xlu0 %v792, 16
  %v795 = vpop.permute.xlu0 %794
  %v797 = vmul.f32 %v779, %v795
  %v798 = vsel %vm198, %v698, 0
  %800 = vmatprep.subr.mxu0 0.0
  %801 = vmatpush1.msra.mxu0 0.0
  %802 = vmatprep.subr.mxu0 0.0
  %803 = vmatpush1.msra.mxu0 0.0
  %804 = vmatprep.subr.mxu0 0.0
  %805 = vmatpush1.msra.mxu0 0.0
  %806 = vmatprep.subr.mxu0 0.0
  %807 = vmatpush1.msra.mxu0 0.0
  %808 = vmatprep.subr.mxu0 0.0
  %809 = vmatpush1.msra.mxu0 0.0
  %810 = vmatprep.subr.mxu0 0.0
  %811 = vmatpush1.msra.mxu0 0.0
  %812 = vmatprep.subr.mxu0 0.0
  %813 = vmatpush1.msra.mxu0 0.0
  %814 = vmatprep.subr.mxu0 0.0
  %815 = vmatpush1.msra.mxu0 0.0
  %816 = vmatprep.subr.mxu0 0.0
  %817 = vmatpush1.msra.mxu0 0.0
  %818 = vmatprep.subr.mxu0 0.0
  %819 = vmatpush1.msra.mxu0 0.0
  %820 = vmatprep.subr.mxu0 0.0
  %821 = vmatpush1.msra.mxu0 0.0
  %822 = vmatprep.subr.mxu0 0.0
  %823 = vmatpush1.msra.mxu0 0.0
  %824 = vmatprep.subr.mxu0 0.0
  %825 = vmatpush1.msra.mxu0 %v34
  %826 = vmatprep.subr.mxu0 0.0
  %827 = vmatpush1.msra.mxu0 %v33
  %828 = vmatprep.subr.mxu0 0.0
  %829 = vmatpush1.msra.mxu0 %v32
  %830 = vmatprep.subr.mxu0 0.0
  %831 = vmatpush1.msra.mxu0 %v31
  %832 = vmatprep.subr.mxu0 0.0
  %833 = vmatpush2.msra.mxu0 0.0
  %834 = vmatprep.subr.mxu0 0.0
  %835 = vmatpush2.msra.mxu0 0.0
  %836 = vmatprep.subr.mxu0 0.0
  %837 = vmatpush2.msra.mxu0 0.0
  %838 = vmatprep.subr.mxu0 0.0
  %839 = vmatpush2.msra.mxu0 0.0
  %840 = vmatprep.subr.mxu0 0.0
  %841 = vmatpush2.msra.mxu0 0.0
  %842 = vmatprep.subr.mxu0 0.0
  %843 = vmatpush2.msra.mxu0 0.0
  %844 = vmatprep.subr.mxu0 0.0
  %845 = vmatpush2.msra.mxu0 0.0
  %846 = vmatprep.subr.mxu0 0.0
  %847 = vmatpush2.msra.mxu0 0.0
  %848 = vmatprep.subr.mxu0 0.0
  %849 = vmatpush2.msra.mxu0 0.0
  %850 = vmatprep.subr.mxu0 0.0
  %851 = vmatpush2.msra.mxu0 0.0
  %852 = vmatprep.subr.mxu0 0.0
  %853 = vmatpush2.msra.mxu0 0.0
  %854 = vmatprep.subr.mxu0 0.0
  %855 = vmatpush2.msra.mxu0 0.0
  %856 = vmatprep.subr.mxu0 0.0
  %857 = vmatpush2.msra.mxu0 0.0
  %858 = vmatprep.subr.mxu0 0.0
  %859 = vmatpush2.msra.mxu0 0.0
  %860 = vmatprep.subr.mxu0 0.0
  %861 = vmatpush2.msra.mxu0 0.0
  %862 = vmatprep.subr.mxu0 0.0
  %863 = vmatpush2.msra.mxu0 0.0
  %864 = vmatprep.mubr.f32.mxu0 0.0
  %865 = vmatmul.mubr.f32.gmra.mxu0 %v798
  %v866 = vpop.f32.mrf.mxu0
  %v867 = vadd.f32 0.0, %v866
  %v868 = vpop.f32.mrf.mxu0
  %869 = vdwg.mxu0
  %v870 = vadd.f32 %v175, %v867
  %v871 = vxor.u32 %v870, 2147483648
  %v872 = vmul.f32 %v871, 1.442695
  %v873 = vpow.pop %v872
  %v874 = vadd.f32 %v873, 1.0
  %v875 = vrcp.pop %v874
  %v876 = vmul.f32 1.0, %v875
  %v877 = vtanh.pop %v870
  %v878 = vmul.f32 %v876, %v689
  %880 = vrot.lane.b32.xlu0 %v877, 32
  %v881 = vpop.permute.xlu0 %880
  %v883 = vmul.f32 %v876, %v881
  %885 = vrot.lane.b32.xlu0 %v883, 32
  %v886 = vpop.permute.xlu0 %885
  %v888 = vadd.f32 %v878, %v886
  %v889 = vtanh.pop %v888
  %891 = vrot.lane.b32.xlu0 %v889, 32
  %v892 = vpop.permute.xlu0 %891
  %v894 = vmul.f32 %v876, %v892
  %896 = vrot.lane.b32.xlu0 %v894, 64
  %v897 = vpop.permute.xlu0 %896
  %v899 = vsel %vm198, %v897, %v797
  %v901 = vsel %vm302, %v899, 0
  %903 = vmatprep.subr.mxu0 0.0
  %904 = vmatpush1.msra.mxu0 0.0
  %905 = vmatprep.subr.mxu0 0.0
  %906 = vmatpush1.msra.mxu0 0.0
  %907 = vmatprep.subr.mxu0 0.0
  %908 = vmatpush1.msra.mxu0 0.0
  %909 = vmatprep.subr.mxu0 0.0
  %910 = vmatpush1.msra.mxu0 0.0
  %911 = vmatprep.subr.mxu0 0.0
  %912 = vmatpush1.msra.mxu0 0.0
  %913 = vmatprep.subr.mxu0 0.0
  %914 = vmatpush1.msra.mxu0 0.0
  %915 = vmatprep.subr.mxu0 0.0
  %916 = vmatpush1.msra.mxu0 0.0
  %917 = vmatprep.subr.mxu0 0.0
  %918 = vmatpush1.msra.mxu0 0.0
  %919 = vmatprep.subr.mxu0 0.0
  %920 = vmatpush1.msra.mxu0 0.0
  %921 = vmatprep.subr.mxu0 0.0
  %922 = vmatpush1.msra.mxu0 0.0
  %923 = vmatprep.subr.mxu0 0.0
  %924 = vmatpush1.msra.mxu0 %v40
  %925 = vmatprep.subr.mxu0 0.0
  %926 = vmatpush1.msra.mxu0 %v39
  %927 = vmatprep.subr.mxu0 0.0
  %928 = vmatpush1.msra.mxu0 %v38
  %929 = vmatprep.subr.mxu0 0.0
  %930 = vmatpush1.msra.mxu0 %v37
  %931 = vmatprep.subr.mxu0 0.0
  %932 = vmatpush1.msra.mxu0 %v36
  %933 = vmatprep.subr.mxu0 0.0
  %934 = vmatpush1.msra.mxu0 %v35
  %935 = vmatprep.subr.mxu0 0.0
  %936 = vmatpush2.msra.mxu0 0.0
  %937 = vmatprep.subr.mxu0 0.0
  %938 = vmatpush2.msra.mxu0 0.0
  %939 = vmatprep.subr.mxu0 0.0
  %940 = vmatpush2.msra.mxu0 0.0
  %941 = vmatprep.subr.mxu0 0.0
  %942 = vmatpush2.msra.mxu0 0.0
  %943 = vmatprep.subr.mxu0 0.0
  %944 = vmatpush2.msra.mxu0 0.0
  %945 = vmatprep.subr.mxu0 0.0
  %946 = vmatpush2.msra.mxu0 0.0
  %947 = vmatprep.subr.mxu0 0.0
  %948 = vmatpush2.msra.mxu0 0.0
  %949 = vmatprep.subr.mxu0 0.0
  %950 = vmatpush2.msra.mxu0 0.0
  %951 = vmatprep.subr.mxu0 0.0
  %952 = vmatpush2.msra.mxu0 0.0
  %953 = vmatprep.subr.mxu0 0.0
  %954 = vmatpush2.msra.mxu0 0.0
  %955 = vmatprep.subr.mxu0 0.0
  %956 = vmatpush2.msra.mxu0 0.0
  %957 = vmatprep.subr.mxu0 0.0
  %958 = vmatpush2.msra.mxu0 0.0
  %959 = vmatprep.subr.mxu0 0.0
  %960 = vmatpush2.msra.mxu0 0.0
  %961 = vmatprep.subr.mxu0 0.0
  %962 = vmatpush2.msra.mxu0 0.0
  %963 = vmatprep.subr.mxu0 0.0
  %964 = vmatpush2.msra.mxu0 0.0
  %965 = vmatprep.subr.mxu0 0.0
  %966 = vmatpush2.msra.mxu0 0.0
  %967 = vmatprep.mubr.f32.mxu0 0.0
  %968 = vmatmul.mubr.f32.gmra.mxu0 %v901
  %v969 = vpop.f32.mrf.mxu0
  %v970 = vadd.f32 %v46, %v969
  %v971 = vpop.f32.mrf.mxu0
  %972 = vdwg.mxu0
  %v973 = vxor.u32 %v970, 2147483648
  %v974 = vmul.f32 %v973, 1.442695
  %v975 = vpow.pop %v974
  %v976 = vadd.f32 %v975, 1.0
  %v977 = vrcp.pop %v976
  %v978 = vmul.f32 1.0, %v977
  %v979 = vtanh.pop %v970
  %v980 = vmul.f32 %v978, %v791
  %982 = vrot.lane.b32.xlu0 %v979, 80
  %v983 = vpop.permute.xlu0 %982
  %v985 = vmul.f32 %v978, %v983
  %987 = vrot.lane.b32.xlu0 %v985, 16
  %v988 = vpop.permute.xlu0 %987
  %v990 = vadd.f32 %v980, %v988
  %v991 = vtanh.pop %v990
  %993 = vrot.lane.b32.xlu0 %v991, 16
  %v994 = vpop.permute.xlu0 %993
  %v996 = vmul.f32 %v978, %v994
  %v997 = vsel %vm198, %v897, 0
  %999 = vmatprep.subr.mxu0 0.0
  %1000 = vmatpush1.msra.mxu0 0.0
  %1001 = vmatprep.subr.mxu0 0.0
  %1002 = vmatpush1.msra.mxu0 0.0
  %1003 = vmatprep.subr.mxu0 0.0
  %1004 = vmatpush1.msra.mxu0 0.0
  %1005 = vmatprep.subr.mxu0 0.0
  %1006 = vmatpush1.msra.mxu0 0.0
  %1007 = vmatprep.subr.mxu0 0.0
  %1008 = vmatpush1.msra.mxu0 0.0
  %1009 = vmatprep.subr.mxu0 0.0
  %1010 = vmatpush1.msra.mxu0 0.0
  %1011 = vmatprep.subr.mxu0 0.0
  %1012 = vmatpush1.msra.mxu0 0.0
  %1013 = vmatprep.subr.mxu0 0.0
  %1014 = vmatpush1.msra.mxu0 0.0
  %1015 = vmatprep.subr.mxu0 0.0
  %1016 = vmatpush1.msra.mxu0 0.0
  %1017 = vmatprep.subr.mxu0 0.0
  %1018 = vmatpush1.msra.mxu0 0.0
  %1019 = vmatprep.subr.mxu0 0.0
  %1020 = vmatpush1.msra.mxu0 0.0
  %1021 = vmatprep.subr.mxu0 0.0
  %1022 = vmatpush1.msra.mxu0 0.0
  %1023 = vmatprep.subr.mxu0 0.0
  %1024 = vmatpush1.msra.mxu0 %v34
  %1025 = vmatprep.subr.mxu0 0.0
  %1026 = vmatpush1.msra.mxu0 %v33
  %1027 = vmatprep.subr.mxu0 0.0
  %1028 = vmatpush1.msra.mxu0 %v32
  %1029 = vmatprep.subr.mxu0 0.0
  %1030 = vmatpush1.msra.mxu0 %v31
  %1031 = vmatprep.subr.mxu0 0.0
  %1032 = vmatpush2.msra.mxu0 0.0
  %1033 = vmatprep.subr.mxu0 0.0
  %1034 = vmatpush2.msra.mxu0 0.0
  %1035 = vmatprep.subr.mxu0 0.0
  %1036 = vmatpush2.msra.mxu0 0.0
  %1037 = vmatprep.subr.mxu0 0.0
  %1038 = vmatpush2.msra.mxu0 0.0
  %1039 = vmatprep.subr.mxu0 0.0
  %1040 = vmatpush2.msra.mxu0 0.0
  %1041 = vmatprep.subr.mxu0 0.0
  %1042 = vmatpush2.msra.mxu0 0.0
  %1043 = vmatprep.subr.mxu0 0.0
  %1044 = vmatpush2.msra.mxu0 0.0
  %1045 = vmatprep.subr.mxu0 0.0
  %1046 = vmatpush2.msra.mxu0 0.0
  %1047 = vmatprep.subr.mxu0 0.0
  %1048 = vmatpush2.msra.mxu0 0.0
  %1049 = vmatprep.subr.mxu0 0.0
  %1050 = vmatpush2.msra.mxu0 0.0
  %1051 = vmatprep.subr.mxu0 0.0
  %1052 = vmatpush2.msra.mxu0 0.0
  %1053 = vmatprep.subr.mxu0 0.0
  %1054 = vmatpush2.msra.mxu0 0.0
  %1055 = vmatprep.subr.mxu0 0.0
  %1056 = vmatpush2.msra.mxu0 0.0
  %1057 = vmatprep.subr.mxu0 0.0
  %1058 = vmatpush2.msra.mxu0 0.0
  %1059 = vmatprep.subr.mxu0 0.0
  %1060 = vmatpush2.msra.mxu0 0.0
  %1061 = vmatprep.subr.mxu0 0.0
  %1062 = vmatpush2.msra.mxu0 0.0
  %1063 = vmatprep.mubr.f32.mxu0 0.0
  %1064 = vmatmul.mubr.f32.gmra.mxu0 %v997
  %v1065 = vpop.f32.mrf.mxu0
  %v1066 = vadd.f32 0.0, %v1065
  %v1067 = vpop.f32.mrf.mxu0
  %1068 = vdwg.mxu0
  %v1069 = vadd.f32 %v180, %v1066
  %v1070 = vxor.u32 %v1069, 2147483648
  %v1071 = vmul.f32 %v1070, 1.442695
  %v1072 = vpow.pop %v1071
  %v1073 = vadd.f32 %v1072, 1.0
  %v1074 = vrcp.pop %v1073
  %v1075 = vmul.f32 1.0, %v1074
  %v1076 = vtanh.pop %v1069
  %v1077 = vmul.f32 %v1075, %v888
  %1079 = vrot.lane.b32.xlu0 %v1076, 32
  %v1080 = vpop.permute.xlu0 %1079
  %v1082 = vmul.f32 %v1075, %v1080
  %1084 = vrot.lane.b32.xlu0 %v1082, 32
  %v1085 = vpop.permute.xlu0 %1084
  %v1087 = vadd.f32 %v1077, %v1085
  %v1088 = vtanh.pop %v1087
  %1090 = vrot.lane.b32.xlu0 %v1088, 32
  %v1091 = vpop.permute.xlu0 %1090
  %v1093 = vmul.f32 %v1075, %v1091
  %1095 = vrot.lane.b32.xlu0 %v1093, 64
  %v1096 = vpop.permute.xlu0 %1095
  %v1098 = vsel %vm198, %v1096, %v996
  %v1100 = vsel %vm302, %v1098, 0
  %1102 = vmatprep.subr.mxu0 0.0
  %1103 = vmatpush1.msra.mxu0 0.0
  %1104 = vmatprep.subr.mxu0 0.0
  %1105 = vmatpush1.msra.mxu0 0.0
  %1106 = vmatprep.subr.mxu0 0.0
  %1107 = vmatpush1.msra.mxu0 0.0
  %1108 = vmatprep.subr.mxu0 0.0
  %1109 = vmatpush1.msra.mxu0 0.0
  %1110 = vmatprep.subr.mxu0 0.0
  %1111 = vmatpush1.msra.mxu0 0.0
  %1112 = vmatprep.subr.mxu0 0.0
  %1113 = vmatpush1.msra.mxu0 0.0
  %1114 = vmatprep.subr.mxu0 0.0
  %1115 = vmatpush1.msra.mxu0 0.0
  %1116 = vmatprep.subr.mxu0 0.0
  %1117 = vmatpush1.msra.mxu0 0.0
  %1118 = vmatprep.subr.mxu0 0.0
  %1119 = vmatpush1.msra.mxu0 0.0
  %1120 = vmatprep.subr.mxu0 0.0
  %1121 = vmatpush1.msra.mxu0 0.0
  %1122 = vmatprep.subr.mxu0 0.0
  %1123 = vmatpush1.msra.mxu0 %v40
  %1124 = vmatprep.subr.mxu0 0.0
  %1125 = vmatpush1.msra.mxu0 %v39
  %1126 = vmatprep.subr.mxu0 0.0
  %1127 = vmatpush1.msra.mxu0 %v38
  %1128 = vmatprep.subr.mxu0 0.0
  %1129 = vmatpush1.msra.mxu0 %v37
  %1130 = vmatprep.subr.mxu0 0.0
  %1131 = vmatpush1.msra.mxu0 %v36
  %1132 = vmatprep.subr.mxu0 0.0
  %1133 = vmatpush1.msra.mxu0 %v35
  %1134 = vmatprep.subr.mxu0 0.0
  %1135 = vmatpush2.msra.mxu0 0.0
  %1136 = vmatprep.subr.mxu0 0.0
  %1137 = vmatpush2.msra.mxu0 0.0
  %1138 = vmatprep.subr.mxu0 0.0
  %1139 = vmatpush2.msra.mxu0 0.0
  %1140 = vmatprep.subr.mxu0 0.0
  %1141 = vmatpush2.msra.mxu0 0.0
  %1142 = vmatprep.subr.mxu0 0.0
  %1143 = vmatpush2.msra.mxu0 0.0
  %1144 = vmatprep.subr.mxu0 0.0
  %1145 = vmatpush2.msra.mxu0 0.0
  %1146 = vmatprep.subr.mxu0 0.0
  %1147 = vmatpush2.msra.mxu0 0.0
  %1148 = vmatprep.subr.mxu0 0.0
  %1149 = vmatpush2.msra.mxu0 0.0
  %1150 = vmatprep.subr.mxu0 0.0
  %1151 = vmatpush2.msra.mxu0 0.0
  %1152 = vmatprep.subr.mxu0 0.0
  %1153 = vmatpush2.msra.mxu0 0.0
  %1154 = vmatprep.subr.mxu0 0.0
  %1155 = vmatpush2.msra.mxu0 0.0
  %1156 = vmatprep.subr.mxu0 0.0
  %1157 = vmatpush2.msra.mxu0 0.0
  %1158 = vmatprep.subr.mxu0 0.0
  %1159 = vmatpush2.msra.mxu0 0.0
  %1160 = vmatprep.subr.mxu0 0.0
  %1161 = vmatpush2.msra.mxu0 0.0
  %1162 = vmatprep.subr.mxu0 0.0
  %1163 = vmatpush2.msra.mxu0 0.0
  %1164 = vmatprep.subr.mxu0 0.0
  %1165 = vmatpush2.msra.mxu0 0.0
  %1166 = vmatprep.mubr.f32.mxu0 0.0
  %1167 = vmatmul.mubr.f32.gmra.mxu0 %v1100
  %v1168 = vpop.f32.mrf.mxu0
  %v1169 = vadd.f32 %v46, %v1168
  %v1170 = vpop.f32.mrf.mxu0
  %1171 = vdwg.mxu0
  %v1172 = vxor.u32 %v1169, 2147483648
  %v1173 = vmul.f32 %v1172, 1.442695
  %v1174 = vpow.pop %v1173
  %v1175 = vadd.f32 %v1174, 1.0
  %v1176 = vrcp.pop %v1175
  %v1177 = vmul.f32 1.0, %v1176
  %v1178 = vtanh.pop %v1169
  %v1179 = vmul.f32 %v1177, %v990
  %1181 = vrot.lane.b32.xlu0 %v1178, 80
  %v1182 = vpop.permute.xlu0 %1181
  %v1184 = vmul.f32 %v1177, %v1182
  %1186 = vrot.lane.b32.xlu0 %v1184, 16
  %v1187 = vpop.permute.xlu0 %1186
  %v1189 = vadd.f32 %v1179, %v1187
  %v1190 = vtanh.pop %v1189
  %1192 = vrot.lane.b32.xlu0 %v1190, 16
  %v1193 = vpop.permute.xlu0 %1192
  %v1195 = vmul.f32 %v1177, %v1193
  %v1196 = vsel %vm198, %v1096, 0
  %1198 = vmatprep.subr.mxu0 0.0
  %1199 = vmatpush1.msra.mxu0 0.0
  %1200 = vmatprep.subr.mxu0 0.0
  %1201 = vmatpush1.msra.mxu0 0.0
  %1202 = vmatprep.subr.mxu0 0.0
  %1203 = vmatpush1.msra.mxu0 0.0
  %1204 = vmatprep.subr.mxu0 0.0
  %1205 = vmatpush1.msra.mxu0 0.0
  %1206 = vmatprep.subr.mxu0 0.0
  %1207 = vmatpush1.msra.mxu0 0.0
  %1208 = vmatprep.subr.mxu0 0.0
  %1209 = vmatpush1.msra.mxu0 0.0
  %1210 = vmatprep.subr.mxu0 0.0
  %1211 = vmatpush1.msra.mxu0 0.0
  %1212 = vmatprep.subr.mxu0 0.0
  %1213 = vmatpush1.msra.mxu0 0.0
  %1214 = vmatprep.subr.mxu0 0.0
  %1215 = vmatpush1.msra.mxu0 0.0
  %1216 = vmatprep.subr.mxu0 0.0
  %1217 = vmatpush1.msra.mxu0 0.0
  %1218 = vmatprep.subr.mxu0 0.0
  %1219 = vmatpush1.msra.mxu0 0.0
  %1220 = vmatprep.subr.mxu0 0.0
  %1221 = vmatpush1.msra.mxu0 0.0
  %1222 = vmatprep.subr.mxu0 0.0
  %1223 = vmatpush1.msra.mxu0 %v34
  %1224 = vmatprep.subr.mxu0 0.0
  %1225 = vmatpush1.msra.mxu0 %v33
  %1226 = vmatprep.subr.mxu0 0.0
  %1227 = vmatpush1.msra.mxu0 %v32
  %1228 = vmatprep.subr.mxu0 0.0
  %1229 = vmatpush1.msra.mxu0 %v31
  %1230 = vmatprep.subr.mxu0 0.0
  %1231 = vmatpush2.msra.mxu0 0.0
  %1232 = vmatprep.subr.mxu0 0.0
  %1233 = vmatpush2.msra.mxu0 0.0
  %1234 = vmatprep.subr.mxu0 0.0
  %1235 = vmatpush2.msra.mxu0 0.0
  %1236 = vmatprep.subr.mxu0 0.0
  %1237 = vmatpush2.msra.mxu0 0.0
  %1238 = vmatprep.subr.mxu0 0.0
  %1239 = vmatpush2.msra.mxu0 0.0
  %1240 = vmatprep.subr.mxu0 0.0
  %1241 = vmatpush2.msra.mxu0 0.0
  %1242 = vmatprep.subr.mxu0 0.0
  %1243 = vmatpush2.msra.mxu0 0.0
  %1244 = vmatprep.subr.mxu0 0.0
  %1245 = vmatpush2.msra.mxu0 0.0
  %1246 = vmatprep.subr.mxu0 0.0
  %1247 = vmatpush2.msra.mxu0 0.0
  %1248 = vmatprep.subr.mxu0 0.0
  %1249 = vmatpush2.msra.mxu0 0.0
  %1250 = vmatprep.subr.mxu0 0.0
  %1251 = vmatpush2.msra.mxu0 0.0
  %1252 = vmatprep.subr.mxu0 0.0
  %1253 = vmatpush2.msra.mxu0 0.0
  %1254 = vmatprep.subr.mxu0 0.0
  %1255 = vmatpush2.msra.mxu0 0.0
  %1256 = vmatprep.subr.mxu0 0.0
  %1257 = vmatpush2.msra.mxu0 0.0
  %1258 = vmatprep.subr.mxu0 0.0
  %1259 = vmatpush2.msra.mxu0 0.0
  %1260 = vmatprep.subr.mxu0 0.0
  %1261 = vmatpush2.msra.mxu0 0.0
  %1262 = vmatprep.mubr.f32.mxu0 0.0
  %1263 = vmatmul.mubr.f32.gmra.mxu0 %v1196
  %v1264 = vpop.f32.mrf.mxu0
  %v1265 = vadd.f32 0.0, %v1264
  %v1266 = vpop.f32.mrf.mxu0
  %1267 = vdwg.mxu0
  %v1268 = vadd.f32 %v185, %v1265
  %v1269 = vxor.u32 %v1268, 2147483648
  %v1270 = vmul.f32 %v1269, 1.442695
  %v1271 = vpow.pop %v1270
  %v1272 = vadd.f32 %v1271, 1.0
  %v1273 = vrcp.pop %v1272
  %v1274 = vmul.f32 1.0, %v1273
  %v1275 = vtanh.pop %v1268
  %v1276 = vmul.f32 %v1274, %v1087
  %1278 = vrot.lane.b32.xlu0 %v1275, 32
  %v1279 = vpop.permute.xlu0 %1278
  %v1281 = vmul.f32 %v1274, %v1279
  %1283 = vrot.lane.b32.xlu0 %v1281, 32
  %v1284 = vpop.permute.xlu0 %1283
  %v1286 = vadd.f32 %v1276, %v1284
  %v1287 = vtanh.pop %v1286
  %1289 = vrot.lane.b32.xlu0 %v1287, 32
  %v1290 = vpop.permute.xlu0 %1289
  %v1292 = vmul.f32 %v1274, %v1290
  %1294 = vrot.lane.b32.xlu0 %v1292, 64
  %v1295 = vpop.permute.xlu0 %1294
  %v1297 = vsel %vm198, %v1295, %v1195
  %v1299 = vsel %vm302, %v1297, 0
  %1301 = vmatprep.subr.mxu0 0.0
  %1302 = vmatpush1.msra.mxu0 0.0
  %1303 = vmatprep.subr.mxu0 0.0
  %1304 = vmatpush1.msra.mxu0 0.0
  %1305 = vmatprep.subr.mxu0 0.0
  %1306 = vmatpush1.msra.mxu0 0.0
  %1307 = vmatprep.subr.mxu0 0.0
  %1308 = vmatpush1.msra.mxu0 0.0
  %1309 = vmatprep.subr.mxu0 0.0
  %1310 = vmatpush1.msra.mxu0 0.0
  %1311 = vmatprep.subr.mxu0 0.0
  %1312 = vmatpush1.msra.mxu0 0.0
  %1313 = vmatprep.subr.mxu0 0.0
  %1314 = vmatpush1.msra.mxu0 0.0
  %1315 = vmatprep.subr.mxu0 0.0
  %1316 = vmatpush1.msra.mxu0 0.0
  %1317 = vmatprep.subr.mxu0 0.0
  %1318 = vmatpush1.msra.mxu0 0.0
  %1319 = vmatprep.subr.mxu0 0.0
  %1320 = vmatpush1.msra.mxu0 0.0
  %1321 = vmatprep.subr.mxu0 0.0
  %1322 = vmatpush1.msra.mxu0 %v40
  %1323 = vmatprep.subr.mxu0 0.0
  %1324 = vmatpush1.msra.mxu0 %v39
  %1325 = vmatprep.subr.mxu0 0.0
  %1326 = vmatpush1.msra.mxu0 %v38
  %1327 = vmatprep.subr.mxu0 0.0
  %1328 = vmatpush1.msra.mxu0 %v37
  %1329 = vmatprep.subr.mxu0 0.0
  %1330 = vmatpush1.msra.mxu0 %v36
  %1331 = vmatprep.subr.mxu0 0.0
  %1332 = vmatpush1.msra.mxu0 %v35
  %1333 = vmatprep.subr.mxu0 0.0
  %1334 = vmatpush2.msra.mxu0 0.0
  %1335 = vmatprep.subr.mxu0 0.0
  %1336 = vmatpush2.msra.mxu0 0.0
  %1337 = vmatprep.subr.mxu0 0.0
  %1338 = vmatpush2.msra.mxu0 0.0
  %1339 = vmatprep.subr.mxu0 0.0
  %1340 = vmatpush2.msra.mxu0 0.0
  %1341 = vmatprep.subr.mxu0 0.0
  %1342 = vmatpush2.msra.mxu0 0.0
  %1343 = vmatprep.subr.mxu0 0.0
  %1344 = vmatpush2.msra.mxu0 0.0
  %1345 = vmatprep.subr.mxu0 0.0
  %1346 = vmatpush2.msra.mxu0 0.0
  %1347 = vmatprep.subr.mxu0 0.0
  %1348 = vmatpush2.msra.mxu0 0.0
  %1349 = vmatprep.subr.mxu0 0.0
  %1350 = vmatpush2.msra.mxu0 0.0
  %1351 = vmatprep.subr.mxu0 0.0
  %1352 = vmatpush2.msra.mxu0 0.0
  %1353 = vmatprep.subr.mxu0 0.0
  %1354 = vmatpush2.msra.mxu0 0.0
  %1355 = vmatprep.subr.mxu0 0.0
  %1356 = vmatpush2.msra.mxu0 0.0
  %1357 = vmatprep.subr.mxu0 0.0
  %1358 = vmatpush2.msra.mxu0 0.0
  %1359 = vmatprep.subr.mxu0 0.0
  %1360 = vmatpush2.msra.mxu0 0.0
  %1361 = vmatprep.subr.mxu0 0.0
  %1362 = vmatpush2.msra.mxu0 0.0
  %1363 = vmatprep.subr.mxu0 0.0
  %1364 = vmatpush2.msra.mxu0 0.0
  %1365 = vmatprep.mubr.f32.mxu0 0.0
  %1366 = vmatmul.mubr.f32.gmra.mxu0 %v1299
  %v1367 = vpop.f32.mrf.mxu0
  %v1368 = vadd.f32 %v46, %v1367
  %v1369 = vpop.f32.mrf.mxu0
  %1370 = vdwg.mxu0
  %v1371 = vxor.u32 %v1368, 2147483648
  %v1372 = vmul.f32 %v1371, 1.442695
  %v1373 = vpow.pop %v1372
  %v1374 = vadd.f32 %v1373, 1.0
  %v1375 = vrcp.pop %v1374
  %v1376 = vmul.f32 1.0, %v1375
  %v1377 = vtanh.pop %v1368
  %v1378 = vmul.f32 %v1376, %v1189
  %1380 = vrot.lane.b32.xlu0 %v1377, 80
  %v1381 = vpop.permute.xlu0 %1380
  %v1383 = vmul.f32 %v1376, %v1381
  %1385 = vrot.lane.b32.xlu0 %v1383, 16
  %v1386 = vpop.permute.xlu0 %1385
  %v1388 = vadd.f32 %v1378, %v1386
  %v1389 = vtanh.pop %v1388
  %1391 = vrot.lane.b32.xlu0 %v1389, 16
  %v1392 = vpop.permute.xlu0 %1391
  %v1394 = vmul.f32 %v1376, %v1392
  %v1395 = vsel %vm198, %v1295, 0
  %1397 = vmatprep.subr.mxu0 0.0
  %1398 = vmatpush1.msra.mxu0 0.0
  %1399 = vmatprep.subr.mxu0 0.0
  %1400 = vmatpush1.msra.mxu0 0.0
  %1401 = vmatprep.subr.mxu0 0.0
  %1402 = vmatpush1.msra.mxu0 0.0
  %1403 = vmatprep.subr.mxu0 0.0
  %1404 = vmatpush1.msra.mxu0 0.0
  %1405 = vmatprep.subr.mxu0 0.0
  %1406 = vmatpush1.msra.mxu0 0.0
  %1407 = vmatprep.subr.mxu0 0.0
  %1408 = vmatpush1.msra.mxu0 0.0
  %1409 = vmatprep.subr.mxu0 0.0
  %1410 = vmatpush1.msra.mxu0 0.0
  %1411 = vmatprep.subr.mxu0 0.0
  %1412 = vmatpush1.msra.mxu0 0.0
  %1413 = vmatprep.subr.mxu0 0.0
  %1414 = vmatpush1.msra.mxu0 0.0
  %1415 = vmatprep.subr.mxu0 0.0
  %1416 = vmatpush1.msra.mxu0 0.0
  %1417 = vmatprep.subr.mxu0 0.0
  %1418 = vmatpush1.msra.mxu0 0.0
  %1419 = vmatprep.subr.mxu0 0.0
  %1420 = vmatpush1.msra.mxu0 0.0
  %1421 = vmatprep.subr.mxu0 0.0
  %1422 = vmatpush1.msra.mxu0 %v34
  %1423 = vmatprep.subr.mxu0 0.0
  %1424 = vmatpush1.msra.mxu0 %v33
  %1425 = vmatprep.subr.mxu0 0.0
  %1426 = vmatpush1.msra.mxu0 %v32
  %1427 = vmatprep.subr.mxu0 0.0
  %1428 = vmatpush1.msra.mxu0 %v31
  %1429 = vmatprep.subr.mxu0 0.0
  %1430 = vmatpush2.msra.mxu0 0.0
  %1431 = vmatprep.subr.mxu0 0.0
  %1432 = vmatpush2.msra.mxu0 0.0
  %1433 = vmatprep.subr.mxu0 0.0
  %1434 = vmatpush2.msra.mxu0 0.0
  %1435 = vmatprep.subr.mxu0 0.0
  %1436 = vmatpush2.msra.mxu0 0.0
  %1437 = vmatprep.subr.mxu0 0.0
  %1438 = vmatpush2.msra.mxu0 0.0
  %1439 = vmatprep.subr.mxu0 0.0
  %1440 = vmatpush2.msra.mxu0 0.0
  %1441 = vmatprep.subr.mxu0 0.0
  %1442 = vmatpush2.msra.mxu0 0.0
  %1443 = vmatprep.subr.mxu0 0.0
  %1444 = vmatpush2.msra.mxu0 0.0
  %1445 = vmatprep.subr.mxu0 0.0
  %1446 = vmatpush2.msra.mxu0 0.0
  %1447 = vmatprep.subr.mxu0 0.0
  %1448 = vmatpush2.msra.mxu0 0.0
  %1449 = vmatprep.subr.mxu0 0.0
  %1450 = vmatpush2.msra.mxu0 0.0
  %1451 = vmatprep.subr.mxu0 0.0
  %1452 = vmatpush2.msra.mxu0 0.0
  %1453 = vmatprep.subr.mxu0 0.0
  %1454 = vmatpush2.msra.mxu0 0.0
  %1455 = vmatprep.subr.mxu0 0.0
  %1456 = vmatpush2.msra.mxu0 0.0
  %1457 = vmatprep.subr.mxu0 0.0
  %1458 = vmatpush2.msra.mxu0 0.0
  %1459 = vmatprep.subr.mxu0 0.0
  %1460 = vmatpush2.msra.mxu0 0.0
  %1461 = vmatprep.mubr.f32.mxu0 0.0
  %1462 = vmatmul.mubr.f32.gmra.mxu0 %v1395
  %v1463 = vpop.f32.mrf.mxu0
  %v1464 = vadd.f32 0.0, %v1463
  %v1465 = vpop.f32.mrf.mxu0
  %1466 = vdwg.mxu0
  %v1467 = vadd.f32 %v190, %v1464
  %v1468 = vxor.u32 %v1467, 2147483648
  %v1469 = vmul.f32 %v1468, 1.442695
  %v1470 = vpow.pop %v1469
  %v1471 = vadd.f32 %v1470, 1.0
  %v1472 = vrcp.pop %v1471
  %v1473 = vmul.f32 1.0, %v1472
  %v1474 = vtanh.pop %v1467
  %v1475 = vmul.f32 %v1473, %v1286
  %1477 = vrot.lane.b32.xlu0 %v1474, 32
  %v1478 = vpop.permute.xlu0 %1477
  %v1480 = vmul.f32 %v1473, %v1478
  %1482 = vrot.lane.b32.xlu0 %v1480, 32
  %v1483 = vpop.permute.xlu0 %1482
  %v1485 = vadd.f32 %v1475, %v1483
  %v1486 = vtanh.pop %v1485
  %1488 = vrot.lane.b32.xlu0 %v1486, 32
  %v1489 = vpop.permute.xlu0 %1488
  %v1491 = vmul.f32 %v1473, %v1489
  %1493 = vrot.lane.b32.xlu0 %v1491, 64
  %v1494 = vpop.permute.xlu0 %1493
  %v1496 = vsel %vm198, %v1494, %v1394
  %v1498 = vsel %vm302, %v1496, 0
  %1500 = vmatprep.subr.mxu0 0.0
  %1501 = vmatpush1.msra.mxu0 0.0
  %1502 = vmatprep.subr.mxu0 0.0
  %1503 = vmatpush1.msra.mxu0 0.0
  %1504 = vmatprep.subr.mxu0 0.0
  %1505 = vmatpush1.msra.mxu0 0.0
  %1506 = vmatprep.subr.mxu0 0.0
  %1507 = vmatpush1.msra.mxu0 0.0
  %1508 = vmatprep.subr.mxu0 0.0
  %1509 = vmatpush1.msra.mxu0 0.0
  %1510 = vmatprep.subr.mxu0 0.0
  %1511 = vmatpush1.msra.mxu0 0.0
  %1512 = vmatprep.subr.mxu0 0.0
  %1513 = vmatpush1.msra.mxu0 0.0
  %1514 = vmatprep.subr.mxu0 0.0
  %1515 = vmatpush1.msra.mxu0 0.0
  %1516 = vmatprep.subr.mxu0 0.0
  %1517 = vmatpush1.msra.mxu0 0.0
  %1518 = vmatprep.subr.mxu0 0.0
  %1519 = vmatpush1.msra.mxu0 0.0
  %1520 = vmatprep.subr.mxu0 0.0
  %1521 = vmatpush1.msra.mxu0 %v40
  %1522 = vmatprep.subr.mxu0 0.0
  %1523 = vmatpush1.msra.mxu0 %v39
  %1524 = vmatprep.subr.mxu0 0.0
  %1525 = vmatpush1.msra.mxu0 %v38
  %1526 = vmatprep.subr.mxu0 0.0
  %1527 = vmatpush1.msra.mxu0 %v37
  %1528 = vmatprep.subr.mxu0 0.0
  %1529 = vmatpush1.msra.mxu0 %v36
  %1530 = vmatprep.subr.mxu0 0.0
  %1531 = vmatpush1.msra.mxu0 %v35
  %1532 = vmatprep.subr.mxu0 0.0
  %1533 = vmatpush2.msra.mxu0 0.0
  %1534 = vmatprep.subr.mxu0 0.0
  %1535 = vmatpush2.msra.mxu0 0.0
  %1536 = vmatprep.subr.mxu0 0.0
  %1537 = vmatpush2.msra.mxu0 0.0
  %1538 = vmatprep.subr.mxu0 0.0
  %1539 = vmatpush2.msra.mxu0 0.0
  %1540 = vmatprep.subr.mxu0 0.0
  %1541 = vmatpush2.msra.mxu0 0.0
  %1542 = vmatprep.subr.mxu0 0.0
  %1543 = vmatpush2.msra.mxu0 0.0
  %1544 = vmatprep.subr.mxu0 0.0
  %1545 = vmatpush2.msra.mxu0 0.0
  %1546 = vmatprep.subr.mxu0 0.0
  %1547 = vmatpush2.msra.mxu0 0.0
  %1548 = vmatprep.subr.mxu0 0.0
  %1549 = vmatpush2.msra.mxu0 0.0
  %1550 = vmatprep.subr.mxu0 0.0
  %1551 = vmatpush2.msra.mxu0 0.0
  %1552 = vmatprep.subr.mxu0 0.0
  %1553 = vmatpush2.msra.mxu0 0.0
  %1554 = vmatprep.subr.mxu0 0.0
  %1555 = vmatpush2.msra.mxu0 0.0
  %1556 = vmatprep.subr.mxu0 0.0
  %1557 = vmatpush2.msra.mxu0 0.0
  %1558 = vmatprep.subr.mxu0 0.0
  %1559 = vmatpush2.msra.mxu0 0.0
  %1560 = vmatprep.subr.mxu0 0.0
  %1561 = vmatpush2.msra.mxu0 0.0
  %1562 = vmatprep.subr.mxu0 0.0
  %1563 = vmatpush2.msra.mxu0 0.0
  %1564 = vmatprep.mubr.f32.mxu0 0.0
  %1565 = vmatmul.mubr.f32.gmra.mxu0 %v1498
  %v1566 = vpop.f32.mrf.mxu0
  %v1567 = vadd.f32 %v46, %v1566
  %v1568 = vpop.f32.mrf.mxu0
  %1569 = vdwg.mxu0
  %v1570 = vxor.u32 %v1567, 2147483648
  %v1571 = vmul.f32 %v1570, 1.442695
  %v1572 = vpow.pop %v1571
  %v1573 = vadd.f32 %v1572, 1.0
  %v1574 = vrcp.pop %v1573
  %v1575 = vmul.f32 1.0, %v1574
  %v1576 = vtanh.pop %v1567
  %v1577 = vmul.f32 %v1575, %v1388
  %1579 = vrot.lane.b32.xlu0 %v1576, 80
  %v1580 = vpop.permute.xlu0 %1579
  %v1582 = vmul.f32 %v1575, %v1580
  %1584 = vrot.lane.b32.xlu0 %v1582, 16
  %v1585 = vpop.permute.xlu0 %1584
  %v1587 = vadd.f32 %v1577, %v1585
  %v1588 = vtanh.pop %v1587
  %1590 = vrot.lane.b32.xlu0 %v1588, 16
  %v1591 = vpop.permute.xlu0 %1590
  %v1593 = vmul.f32 %v1575, %v1591
  %v1594 = vsel %vm198, %v1494, 0
  %1596 = vmatprep.subr.mxu0 0.0
  %1597 = vmatpush1.msra.mxu0 0.0
  %1598 = vmatprep.subr.mxu0 0.0
  %1599 = vmatpush1.msra.mxu0 0.0
  %1600 = vmatprep.subr.mxu0 0.0
  %1601 = vmatpush1.msra.mxu0 0.0
  %1602 = vmatprep.subr.mxu0 0.0
  %1603 = vmatpush1.msra.mxu0 0.0
  %1604 = vmatprep.subr.mxu0 0.0
  %1605 = vmatpush1.msra.mxu0 0.0
  %1606 = vmatprep.subr.mxu0 0.0
  %1607 = vmatpush1.msra.mxu0 0.0
  %1608 = vmatprep.subr.mxu0 0.0
  %1609 = vmatpush1.msra.mxu0 0.0
  %1610 = vmatprep.subr.mxu0 0.0
  %1611 = vmatpush1.msra.mxu0 0.0
  %1612 = vmatprep.subr.mxu0 0.0
  %1613 = vmatpush1.msra.mxu0 0.0
  %1614 = vmatprep.subr.mxu0 0.0
  %1615 = vmatpush1.msra.mxu0 0.0
  %1616 = vmatprep.subr.mxu0 0.0
  %1617 = vmatpush1.msra.mxu0 0.0
  %1618 = vmatprep.subr.mxu0 0.0
  %1619 = vmatpush1.msra.mxu0 0.0
  %1620 = vmatprep.subr.mxu0 0.0
  %1621 = vmatpush1.msra.mxu0 %v34
  %1622 = vmatprep.subr.mxu0 0.0
  %1623 = vmatpush1.msra.mxu0 %v33
  %1624 = vmatprep.subr.mxu0 0.0
  %1625 = vmatpush1.msra.mxu0 %v32
  %1626 = vmatprep.subr.mxu0 0.0
  %1627 = vmatpush1.msra.mxu0 %v31
  %1628 = vmatprep.subr.mxu0 0.0
  %1629 = vmatpush2.msra.mxu0 0.0
  %1630 = vmatprep.subr.mxu0 0.0
  %1631 = vmatpush2.msra.mxu0 0.0
  %1632 = vmatprep.subr.mxu0 0.0
  %1633 = vmatpush2.msra.mxu0 0.0
  %1634 = vmatprep.subr.mxu0 0.0
  %1635 = vmatpush2.msra.mxu0 0.0
  %1636 = vmatprep.subr.mxu0 0.0
  %1637 = vmatpush2.msra.mxu0 0.0
  %1638 = vmatprep.subr.mxu0 0.0
  %1639 = vmatpush2.msra.mxu0 0.0
  %1640 = vmatprep.subr.mxu0 0.0
  %1641 = vmatpush2.msra.mxu0 0.0
  %1642 = vmatprep.subr.mxu0 0.0
  %1643 = vmatpush2.msra.mxu0 0.0
  %1644 = vmatprep.subr.mxu0 0.0
  %1645 = vmatpush2.msra.mxu0 0.0
  %1646 = vmatprep.subr.mxu0 0.0
  %1647 = vmatpush2.msra.mxu0 0.0
  %1648 = vmatprep.subr.mxu0 0.0
  %1649 = vmatpush2.msra.mxu0 0.0
  %1650 = vmatprep.subr.mxu0 0.0
  %1651 = vmatpush2.msra.mxu0 0.0
  %1652 = vmatprep.subr.mxu0 0.0
  %1653 = vmatpush2.msra.mxu0 0.0
  %1654 = vmatprep.subr.mxu0 0.0
  %1655 = vmatpush2.msra.mxu0 0.0
  %1656 = vmatprep.subr.mxu0 0.0
  %1657 = vmatpush2.msra.mxu0 0.0
  %1658 = vmatprep.subr.mxu0 0.0
  %1659 = vmatpush2.msra.mxu0 0.0
  %1660 = vmatprep.mubr.f32.mxu0 0.0
  %1661 = vmatmul.mubr.f32.gmra.mxu0 %v1594
  %v1662 = vpop.f32.mrf.mxu0
  %v1663 = vadd.f32 0.0, %v1662
  %v1664 = vpop.f32.mrf.mxu0
  %1665 = vdwg.mxu0
  %v1666 = vadd.f32 %v195, %v1663
  %v1667 = vxor.u32 %v1666, 2147483648
  %v1668 = vmul.f32 %v1667, 1.442695
  %v1669 = vpow.pop %v1668
  %v1670 = vadd.f32 %v1669, 1.0
  %v1671 = vrcp.pop %v1670
  %v1672 = vmul.f32 1.0, %v1671
  %v1673 = vtanh.pop %v1666
  %v1674 = vmul.f32 %v1672, %v1485
  %1676 = vrot.lane.b32.xlu0 %v1673, 32
  %v1677 = vpop.permute.xlu0 %1676
  %v1679 = vmul.f32 %v1672, %v1677
  %1681 = vrot.lane.b32.xlu0 %v1679, 32
  %v1682 = vpop.permute.xlu0 %1681
  %v1684 = vadd.f32 %v1674, %v1682
  %v1685 = vtanh.pop %v1684
  %1687 = vrot.lane.b32.xlu0 %v1685, 32
  %v1688 = vpop.permute.xlu0 %1687
  %v1690 = vmul.f32 %v1672, %v1688
  %1692 = vrot.lane.b32.xlu0 %v1690, 64
  %v1693 = vpop.permute.xlu0 %1692
  %v1695 = vsel %vm198, %v1693, %v1593
  %v1697 = vsel %vm302, %v1695, 0
  %1699 = vmatprep.subr.mxu0 0.0
  %1700 = vmatpush1.msra.mxu0 0.0
  %1701 = vmatprep.subr.mxu0 0.0
  %1702 = vmatpush1.msra.mxu0 0.0
  %1703 = vmatprep.subr.mxu0 0.0
  %1704 = vmatpush1.msra.mxu0 0.0
  %1705 = vmatprep.subr.mxu0 0.0
  %1706 = vmatpush1.msra.mxu0 0.0
  %1707 = vmatprep.subr.mxu0 0.0
  %1708 = vmatpush1.msra.mxu0 0.0
  %1709 = vmatprep.subr.mxu0 0.0
  %1710 = vmatpush1.msra.mxu0 0.0
  %1711 = vmatprep.subr.mxu0 0.0
  %1712 = vmatpush1.msra.mxu0 0.0
  %1713 = vmatprep.subr.mxu0 0.0
  %1714 = vmatpush1.msra.mxu0 0.0
  %1715 = vmatprep.subr.mxu0 0.0
  %1716 = vmatpush1.msra.mxu0 0.0
  %1717 = vmatprep.subr.mxu0 0.0
  %1718 = vmatpush1.msra.mxu0 0.0
  %1719 = vmatprep.subr.mxu0 0.0
  %1720 = vmatpush1.msra.mxu0 %v40
  %1721 = vmatprep.subr.mxu0 0.0
  %1722 = vmatpush1.msra.mxu0 %v39
  %1723 = vmatprep.subr.mxu0 0.0
  %1724 = vmatpush1.msra.mxu0 %v38
  %1725 = vmatprep.subr.mxu0 0.0
  %1726 = vmatpush1.msra.mxu0 %v37
  %1727 = vmatprep.subr.mxu0 0.0
  %1728 = vmatpush1.msra.mxu0 %v36
  %1729 = vmatprep.subr.mxu0 0.0
  %1730 = vmatpush1.msra.mxu0 %v35
  %1731 = vmatprep.subr.mxu0 0.0
  %1732 = vmatpush2.msra.mxu0 0.0
  %1733 = vmatprep.subr.mxu0 0.0
  %1734 = vmatpush2.msra.mxu0 0.0
  %1735 = vmatprep.subr.mxu0 0.0
  %1736 = vmatpush2.msra.mxu0 0.0
  %1737 = vmatprep.subr.mxu0 0.0
  %1738 = vmatpush2.msra.mxu0 0.0
  %1739 = vmatprep.subr.mxu0 0.0
  %1740 = vmatpush2.msra.mxu0 0.0
  %1741 = vmatprep.subr.mxu0 0.0
  %1742 = vmatpush2.msra.mxu0 0.0
  %1743 = vmatprep.subr.mxu0 0.0
  %1744 = vmatpush2.msra.mxu0 0.0
  %1745 = vmatprep.subr.mxu0 0.0
  %1746 = vmatpush2.msra.mxu0 0.0
  %1747 = vmatprep.subr.mxu0 0.0
  %1748 = vmatpush2.msra.mxu0 0.0
  %1749 = vmatprep.subr.mxu0 0.0
  %1750 = vmatpush2.msra.mxu0 0.0
  %1751 = vmatprep.subr.mxu0 0.0
  %1752 = vmatpush2.msra.mxu0 0.0
  %1753 = vmatprep.subr.mxu0 0.0
  %1754 = vmatpush2.msra.mxu0 0.0
  %1755 = vmatprep.subr.mxu0 0.0
  %1756 = vmatpush2.msra.mxu0 0.0
  %1757 = vmatprep.subr.mxu0 0.0
  %1758 = vmatpush2.msra.mxu0 0.0
  %1759 = vmatprep.subr.mxu0 0.0
  %1760 = vmatpush2.msra.mxu0 0.0
  %1761 = vmatprep.subr.mxu0 0.0
  %1762 = vmatpush2.msra.mxu0 0.0
  %1763 = vmatprep.mubr.f32.mxu0 0.0
  %1764 = vmatmul.mubr.f32.gmra.mxu0 %v1697
  %v1765 = vpop.f32.mrf.mxu0
  %v1766 = vadd.f32 %v46, %v1765
  %v1767 = vpop.f32.mrf.mxu0
  %1768 = vdwg.mxu0
  %v1769 = vxor.u32 %v1766, 2147483648
  %v1770 = vmul.f32 %v1769, 1.442695
  %v1771 = vpow.pop %v1770
  %v1772 = vadd.f32 %v1771, 1.0
  %v1773 = vrcp.pop %v1772
  %v1774 = vmul.f32 1.0, %v1773
  %v1775 = vtanh.pop %v1766
  %v1776 = vmul.f32 %v1774, %v1587
  %1778 = vrot.lane.b32.xlu0 %v1775, 80
  %v1779 = vpop.permute.xlu0 %1778
  %v1781 = vmul.f32 %v1774, %v1779
  %1783 = vrot.lane.b32.xlu0 %v1781, 16
  %v1784 = vpop.permute.xlu0 %1783
  %v1786 = vadd.f32 %v1776, %v1784
  %v1787 = vtanh.pop %v1786
  %1789 = vrot.lane.b32.xlu0 %v1787, 16
  %v1790 = vpop.permute.xlu0 %1789
  %v1792 = vmul.f32 %v1774, %v1790
  %v1793 = vld [vmem:[%s6] sm:$0xff]
  %v1794 = vld [vmem:[%s6 + $0x8] sm:$0xff]
  %v1795 = vld [vmem:[#allocation2] sm:$0x1]
  %v1797 = vlaneseq
  %v1798 = vshrl.u32 %v1797, 7
  %v1799 = vsub.s32 0, %v1798
  %v1800 = vrot.slane %v1795, %v1799
  %1803 = vrot.lane.b32.xlu0 %v1792, 96
  %v1804 = vpop.permute.xlu0 %1803
  %vm1805 = vcmask 130048
  %v1806 = vsel %vm1805, %v1804, 0
  %1808 = vmatprep.subr.mxu0 0.0
  %1809 = vmatpush1.msra.mxu0 0.0
  %1810 = vmatprep.subr.mxu0 0.0
  %1811 = vmatpush1.msra.mxu0 0.0
  %1812 = vmatprep.subr.mxu0 0.0
  %1813 = vmatpush1.msra.mxu0 0.0
  %1814 = vmatprep.subr.mxu0 0.0
  %1815 = vmatpush1.msra.mxu0 0.0
  %1816 = vmatprep.subr.mxu0 0.0
  %1817 = vmatpush1.msra.mxu0 0.0
  %1818 = vmatprep.subr.mxu0 0.0
  %1819 = vmatpush1.msra.mxu0 0.0
  %1820 = vmatprep.subr.mxu0 0.0
  %1821 = vmatpush1.msra.mxu0 0.0
  %1822 = vmatprep.subr.mxu0 0.0
  %1823 = vmatpush1.msra.mxu0 0.0
  %1824 = vmatprep.subr.mxu0 0.0
  %1825 = vmatpush1.msra.mxu0 0.0
  %1826 = vmatprep.subr.mxu0 0.0
  %1827 = vmatpush1.msra.mxu0 0.0
  %1828 = vmatprep.subr.mxu0 0.0
  %1829 = vmatpush1.msra.mxu0 0.0
  %1830 = vmatprep.subr.mxu0 0.0
  %1831 = vmatpush1.msra.mxu0 0.0
  %1832 = vmatprep.subr.mxu0 0.0
  %1833 = vmatpush1.msra.mxu0 0.0
  %1834 = vmatprep.subr.mxu0 0.0
  %1835 = vmatpush1.msra.mxu0 0.0
  %1836 = vmatprep.subr.mxu0 0.0
  %1837 = vmatpush1.msra.mxu0 %v1794
  %1838 = vmatprep.subr.mxu0 0.0
  %1839 = vmatpush1.msra.mxu0 %v1793
  %1840 = vmatprep.subr.mxu0 0.0
  %1841 = vmatpush2.msra.mxu0 0.0
  %1842 = vmatprep.subr.mxu0 0.0
  %1843 = vmatpush2.msra.mxu0 0.0
  %1844 = vmatprep.subr.mxu0 0.0
  %1845 = vmatpush2.msra.mxu0 0.0
  %1846 = vmatprep.subr.mxu0 0.0
  %1847 = vmatpush2.msra.mxu0 0.0
  %1848 = vmatprep.subr.mxu0 0.0
  %1849 = vmatpush2.msra.mxu0 0.0
  %1850 = vmatprep.subr.mxu0 0.0
  %1851 = vmatpush2.msra.mxu0 0.0
  %1852 = vmatprep.subr.mxu0 0.0
  %1853 = vmatpush2.msra.mxu0 0.0
  %1854 = vmatprep.subr.mxu0 0.0
  %1855 = vmatpush2.msra.mxu0 0.0
  %1856 = vmatprep.subr.mxu0 0.0
  %1857 = vmatpush2.msra.mxu0 0.0
  %1858 = vmatprep.subr.mxu0 0.0
  %1859 = vmatpush2.msra.mxu0 0.0
  %1860 = vmatprep.subr.mxu0 0.0
  %1861 = vmatpush2.msra.mxu0 0.0
  %1862 = vmatprep.subr.mxu0 0.0
  %1863 = vmatpush2.msra.mxu0 0.0
  %1864 = vmatprep.subr.mxu0 0.0
  %1865 = vmatpush2.msra.mxu0 0.0
  %1866 = vmatprep.subr.mxu0 0.0
  %1867 = vmatpush2.msra.mxu0 0.0
  %1868 = vmatprep.subr.mxu0 0.0
  %1869 = vmatpush2.msra.mxu0 0.0
  %1870 = vmatprep.subr.mxu0 0.0
  %1871 = vmatpush2.msra.mxu0 0.0
  %1872 = vmatprep.mubr.f32.mxu0 0.0
  %1873 = vmatmul.mubr.f32.gmra.mxu0 %v1806
  %v1874 = vpop.f32.mrf.mxu0
  %v1875 = vadd.f32 %v1800, %v1874
  %v1876 = vpop.f32.mrf.mxu0
  %1877 = vdwg.mxu0
  %vm1878 = vcmask 7168
  %1879 = vst.msk [vmem:[%s8] sm:$0xff] %vm1878, %v1875
  // Predicated region
  $region34: #{net_forward.1} parent=0 // pred_check
    _
  $region35: #{net_forward.1} parent=0 // pred_check_branch
    %1881 = sbr.rel (0) target = $region37
  $region36: #{net_forward.1} parent=0 // pred_region
    _
  $region37: #{net_forward.1} parent=0 // pred_fallthru
    _
  // Predicated region
  $region38: #{net_forward.1} parent=0 // pred_check
    _
  $region39: #{net_forward.1} parent=0 // pred_check_branch
    %1883 = sbr.rel (0) target = $region41
  $region40: #{net_forward.1} parent=0 // pred_region
    _
  $region41: #{net_forward.1} parent=0 // pred_fallthru
    _

</llo_original>
